<compile_context>
chip_gen: v7x
topology: tpu7x:2x2x1
jax: 0.10.0
libtpu: 0.0.40
codegen_flags: <defaults>
</compile_context>

<pallas_src>
import functools

import jax
import jax.numpy as jnp
from jax.experimental import pallas as pl
from jax.experimental.pallas import tpu as pltpu


# ----------------------------------------------------------------------------
# Helpers
# ----------------------------------------------------------------------------
def _pick_h_tile(out_h, out_w, target_m=128):
    """Largest divisor `th` of out_h such that th*out_w <= target_m (at least 1)."""
    best = 1
    limit = max(target_m, out_w)
    for th in range(1, out_h + 1):
        if out_h % th == 0 and th * out_w <= limit:
            best = th
    return best


# ----------------------------------------------------------------------------
# Pallas kernel: fused dilated conv (single big-K MXU matmul) + BN + ReLU
# ----------------------------------------------------------------------------
def _aspp_kernel(x_ref, w_ref, scale_ref, shift_ref, o_ref, *scratch,
                 kh, kw, dilation, th, out_w):
    """One grid step = one (batch, H-tile).

    x_ref:     (1, Hp, Wp, Cin)           bf16  padded input, resident per batch
    w_ref:     (kh*kw*Cin, Cout)          bf16  weights, constant index_map
    scale_ref: (1, Cout)                  f32   folded BN scale
    shift_ref: (1, Cout)                  f32   folded BN shift
    o_ref:     (1, th, out_w, Cout)       bf16  output row-block
    scratch (only when kh*kw > 1):
      wshift_ref: (kw, th+halo, out_w, Cin) bf16   W-shifted input copies
      lhs_ref:    (th*out_w, kh*kw*Cin)     bf16   im2col LHS tile
    """
    cin = x_ref.shape[-1]
    cout = o_ref.shape[-1]
    m = th * out_w

    h0 = pl.program_id(1) * th
    if th % 8 == 0:
        h0 = pl.multiple_of(h0, 8)

    if kh * kw == 1:
        # 1x1 branch: no im2col needed, direct (M, Cin) x (Cin, Cout) matmul.
        win = x_ref[0, pl.ds(h0, th), :, :]                       # (th, out_w, Cin)
        acc = jnp.dot(win.reshape(m, cin), w_ref[...],
                      preferred_element_type=jnp.float32)
    else:
        wshift_ref, lhs_ref = scratch
        th_in = th + dilation * (kh - 1)

        # Hoist the W-direction tap shift: kw unaligned slices (instead of kh*kw).
        for j in range(kw):
            wshift_ref[j] = x_ref[0, pl.ds(h0, th_in),
                                  pl.ds(j * dilation, out_w), :]   # (th_in, out_w, Cin)

        # Build the (M, kh*kw*Cin) im2col LHS with aligned copies only
        # (H slices of the shifted copies are whole sublane planes).
        for i in range(kh):
            for j in range(kw):
                t = i * kw + j
                lhs_ref[:, t * cin:(t + 1) * cin] = (
                    wshift_ref[j, pl.ds(i * dilation, th)].reshape(m, cin))

        # One big-K contraction on the MXU; accumulation stays in the MXU path.
        acc = jnp.dot(lhs_ref[...], w_ref[...],
                      preferred_element_type=jnp.float32)          # (M, Cout) f32

    # Folded BatchNorm (eval mode) + ReLU in f32, then one lane-dense bf16 store.
    y = acc * scale_ref[...] + shift_ref[...]
    y = jnp.maximum(y, 0.0)
    o_ref[...] = y.reshape(1, th, out_w, cout).astype(o_ref.dtype)


# ----------------------------------------------------------------------------
# Wrapper: PyTorch-style NCHW in, NCHW (or NHWC) out
# ----------------------------------------------------------------------------
def aspp_module_forward(x_nchw, params, *, kernel_size, padding, dilation,
                        eps=1e-5, nhwc_out=False):
    """Forward of _ASPPModule: relu(bn(atrous_conv(x))).  Returns bf16."""
    conv_w = params['conv_w']
    gamma, beta, mean, var = params['bn']

    B, Cin, H, W = x_nchw.shape
    Cout, Cin2, kh, kw = conv_w.shape
    assert Cin == Cin2 and kh == kernel_size and kw == kernel_size
    # Kernel layout assumptions (stride=1 is inherent to _ASPPModule).
    assert Cin % 128 == 0 and Cout % 128 == 0, (
        "kernel is specialized to Cin/Cout that are multiples of 128 "
        f"(got Cin={Cin}, Cout={Cout})")

    out_h = H + 2 * padding - dilation * (kh - 1)
    out_w = W + 2 * padding - dilation * (kw - 1)
    assert out_h > 0 and out_w > 0
    Hp, Wp = H + 2 * padding, W + 2 * padding
    K = kh * kw * Cin

    # H tiling: M = th*out_w output pixels per grid step.
    th = _pick_h_tile(out_h, out_w, target_m=128)
    nh = out_h // th

    # NCHW -> NHWC, spatial zero-pad, bf16 for the MXU (allow_input_fusion lets XLA
    # fold these into the Pallas input DMA instead of separate HBM passes).
    x = jnp.transpose(x_nchw, (0, 2, 3, 1))
    x = jnp.pad(x, ((0, 0), (padding, padding), (padding, padding), (0, 0)))
    x = x.astype(jnp.bfloat16)

    # (Cout, Cin, kh, kw) -> (kh*kw*Cin, Cout), bf16, resident in VMEM.
    w2d = jnp.transpose(conv_w, (2, 3, 1, 0)).reshape(K, Cout).astype(jnp.bfloat16)

    # BatchNorm (inference / running stats) folded into f32 per-channel scale & shift.
    inv_std = gamma / jnp.sqrt(var + eps)
    scale = inv_std.reshape(1, Cout).astype(jnp.float32)
    shift = (beta - mean * inv_std).reshape(1, Cout).astype(jnp.float32)

    # Scratch (only needed for kh*kw > 1) + VMEM budget estimate.
    scratch_shapes = []
    scratch_bytes = 0
    if kh * kw > 1:
        th_in = th + dilation * (kh - 1)
        scratch_shapes = [
            pltpu.VMEM((kw, th_in, out_w, Cin), jnp.bfloat16),   # W-shifted copies
            pltpu.VMEM((th * out_w, K), jnp.bfloat16),           # im2col LHS
        ]
        scratch_bytes = (kw * th_in * out_w * Cin + th * out_w * K) * 2

    vmem_est = (2 * Hp * Wp * Cin * 2          # input block (double buffered)
                + 2 * K * Cout * 2             # weights (conservatively x2)
                + 4 * Cout * 4                 # scale/shift
                + 2 * th * out_w * Cout * 2    # output block (double buffered)
                + scratch_bytes)
    vmem_limit = int(min(max(2 * vmem_est, 8 << 20), 56 << 20))

    kernel = functools.partial(_aspp_kernel, kh=kh, kw=kw, dilation=dilation,
                               th=th, out_w=out_w)

    out_nhwc = pl.pallas_call(
        kernel,
        out_shape=jax.ShapeDtypeStruct((B, out_h, out_w, Cout), jnp.bfloat16),
        grid_spec=pltpu.PrefetchScalarGridSpec(
            num_scalar_prefetch=0,
            grid=(B, nh),
            in_specs=[
                # Full padded image per batch element; constant along the H-tile
                # axis -> fetched once per batch, reused across its H-tiles.
                pl.BlockSpec((1, Hp, Wp, Cin), lambda b, h: (b, 0, 0, 0)),
                pl.BlockSpec((K, Cout), lambda b, h: (0, 0)),
                pl.BlockSpec((1, Cout), lambda b, h: (0, 0)),
                pl.BlockSpec((1, Cout), lambda b, h: (0, 0)),
            ],
            out_specs=pl.BlockSpec((1, th, out_w, Cout), lambda b, h: (b, h, 0, 0)),
            scratch_shapes=scratch_shapes,
        ),
        compiler_params=pltpu.CompilerParams(
            dimension_semantics=("parallel", "parallel"),
            vmem_limit_bytes=vmem_limit,
            allow_input_fusion=[True, False, False, False]),
    )(x, w2d, scale, shift)

    if nhwc_out:
        return out_nhwc
    # Transpose the bf16 output (half the bytes of an f32 transpose).
    return jnp.transpose(out_nhwc, (0, 3, 1, 2))


# ----------------------------------------------------------------------------
# Pure-JAX reference (same bf16-rounded operands; only accumulation order and the
# final bf16 output rounding differ)
# ----------------------------------------------------------------------------
def _reference_forward(x_nchw, params, *, kernel_size, padding, dilation, eps=1e-5):
    conv_w = params['conv_w']
    gamma, beta, mean, var = params['bn']
    x = jnp.transpose(x_nchw, (0, 2, 3, 1))
    x = x.astype(jnp.bfloat16).astype(jnp.float32)
    w_hwio = jnp.transpose(conv_w, (2, 3, 1, 0))
    w_hwio = w_hwio.astype(jnp.bfloat16).astype(jnp.float32)
    y = jax.lax.conv_general_dilated(
        x, w_hwio,
        window_strides=(1, 1),
        padding=((padding, padding), (padding, padding)),
        rhs_dilation=(dilation, dilation),
        dimension_numbers=('NHWC', 'HWIO', 'NHWC'))
    y = (y - mean) * (gamma / jnp.sqrt(var + eps)) + beta
    y = jnp.maximum(y, 0.0)
    return jnp.transpose(y, (0, 3, 1, 2))


if __name__ == "__main__":
    key = jax.random.PRNGKey(0)
    B, Cin, H, W = 2, 128, 16, 16
    Cout = 128

    # Two representative ASPP branch configs: dilated 3x3 and plain 1x1.
    configs = [
        dict(kernel_size=3, padding=2, dilation=2),
        dict(kernel_size=1, padding=0, dilation=1),
    ]

    k_x, k_w1, k_w2, k_m1, k_v1, k_m2, k_v2 = jax.random.split(key, 7)
    x = jax.random.normal(k_x, (B, Cin, H, W), jnp.float32)
    w_keys, m_keys, v_keys = (k_w1, k_w2), (k_m1, k_m2), (k_v1, k_v2)

    for cfg, kwk, kmk, kvk in zip(configs, w_keys, m_keys, v_keys):
        k = cfg['kernel_size']
        fan_in = Cin * k * k
        # kaiming_normal_ (fan_in, gain sqrt(2)) as in _init_weight
        conv_w = jax.random.normal(kwk, (Cout, Cin, k, k), jnp.float32) * (2.0 / fan_in) ** 0.5
        # _init_weight: BN weight=1, bias=0; running stats randomized to exercise folding.
        gamma = jnp.ones((Cout,), jnp.float32)
        beta = jnp.zeros((Cout,), jnp.float32)
        running_mean = 0.1 * jax.random.normal(kmk, (Cout,), jnp.float32)
        running_var = 1.0 + 0.5 * jax.random.uniform(kvk, (Cout,), jnp.float32)
        params = {'conv_w': conv_w, 'bn': (gamma, beta, running_mean, running_var)}

        out = aspp_module_forward(x, params, **cfg)
        out = jax.block_until_ready(out)
        ref = _reference_forward(x, params, **cfg)

        assert out.shape == (B, Cout, H, W), out.shape
        out_f32 = out.astype(jnp.float32)
        assert bool(jnp.all(jnp.isfinite(out_f32)))
        assert bool(jnp.allclose(out_f32, ref, rtol=2e-2, atol=2e-2)), \
            float(jnp.max(jnp.abs(out_f32 - ref)))

    print("KERNEL_OK")
</pallas_src>

<mosaic_0001>
module attributes {stable_mosaic.version = 11 : i64} {
  func.func @_aspp_kernel(%arg0: i32, %arg1: i32, %arg2: memref<1x20x20x128xbf16, #tpu.memory_space<vmem>>, %arg3: memref<1152x128xbf16, #tpu.memory_space<vmem>>, %arg4: memref<1x128xf32, #tpu.memory_space<vmem>>, %arg5: memref<1x128xf32, #tpu.memory_space<vmem>>, %arg6: memref<1x8x16x128xbf16, #tpu.memory_space<vmem>>, %arg7: memref<3x12x16x128xbf16, #tpu.memory_space<vmem>>, %arg8: memref<128x1152xbf16, #tpu.memory_space<vmem>>) attributes {dimension_semantics = [#tpu.dimension_semantics<parallel>, #tpu.dimension_semantics<parallel>], iteration_bounds = array<i64: 2, 2>, scalar_prefetch = 0 : i64, scratch_operands = 2 : i64, tpu.core_type = #tpu.core_type<tc>, window_params = [{transform_indices = @transform_0, window_bounds = array<i64: 1, 20, 20, 128>}, {pipeline_mode = #tpu.pipeline_mode<synchronous>, transform_indices = @transform_1, window_bounds = array<i64: 1152, 128>}, {pipeline_mode = #tpu.pipeline_mode<synchronous>, transform_indices = @transform_2, window_bounds = array<i64: 1, 128>}, {pipeline_mode = #tpu.pipeline_mode<synchronous>, transform_indices = @transform_3, window_bounds = array<i64: 1, 128>}, {transform_indices = @transform_4, window_bounds = array<i64: 1, 8, 16, 128>}]} {
    %c8_i32 = arith.constant 8 : i32
    %0 = arith.muli %arg1, %c8_i32 : i32
    %1 = tpu.assume_multiple %0, 8 : i32
    %c0 = arith.constant 0 : index
    %2 = arith.index_cast %1 : i32 to index
    %c0_0 = arith.constant 0 : index
    %c0_1 = arith.constant 0 : index
    %3 = vector.load %arg2[%c0, %2, %c0_0, %c0_1] : memref<1x20x20x128xbf16, #tpu.memory_space<vmem>>, vector<1x12x16x128xbf16>
    %4 = vector.shape_cast %3 : vector<1x12x16x128xbf16> to vector<12x16x128xbf16>
    %c0_2 = arith.constant 0 : index
    %c0_3 = arith.constant 0 : index
    %c0_4 = arith.constant 0 : index
    %c0_5 = arith.constant 0 : index
    %5 = vector.load %arg7[%c0_2, %c0_3, %c0_4, %c0_5] : memref<3x12x16x128xbf16, #tpu.memory_space<vmem>>, vector<1x12x16x128xbf16>
    %6 = vector.shape_cast %5 : vector<1x12x16x128xbf16> to vector<12x16x128xbf16>
    %7 = vector.shape_cast %4 : vector<12x16x128xbf16> to vector<1x12x16x128xbf16>
    tpu.vector_store %arg7[%c0_2, %c0_3, %c0_4, %c0_5], %7 {strides = array<i32>} : memref<3x12x16x128xbf16, #tpu.memory_space<vmem>>, vector<1x12x16x128xbf16>,
    %c0_6 = arith.constant 0 : index
    %8 = arith.index_cast %1 : i32 to index
    %c2 = arith.constant 2 : index
    %c0_7 = arith.constant 0 : index
    %9 = vector.load %arg2[%c0_6, %8, %c2, %c0_7] : memref<1x20x20x128xbf16, #tpu.memory_space<vmem>>, vector<1x12x16x128xbf16>
    %10 = vector.shape_cast %9 : vector<1x12x16x128xbf16> to vector<12x16x128xbf16>
    %c1 = arith.constant 1 : index
    %c0_8 = arith.constant 0 : index
    %c0_9 = arith.constant 0 : index
    %c0_10 = arith.constant 0 : index
    %11 = vector.load %arg7[%c1, %c0_8, %c0_9, %c0_10] : memref<3x12x16x128xbf16, #tpu.memory_space<vmem>>, vector<1x12x16x128xbf16>
    %12 = vector.shape_cast %11 : vector<1x12x16x128xbf16> to vector<12x16x128xbf16>
    %13 = vector.shape_cast %10 : vector<12x16x128xbf16> to vector<1x12x16x128xbf16>
    tpu.vector_store %arg7[%c1, %c0_8, %c0_9, %c0_10], %13 {strides = array<i32>} : memref<3x12x16x128xbf16, #tpu.memory_space<vmem>>, vector<1x12x16x128xbf16>,
    %c0_11 = arith.constant 0 : index
    %14 = arith.index_cast %1 : i32 to index
    %c4 = arith.constant 4 : index
    %c0_12 = arith.constant 0 : index
    %15 = vector.load %arg2[%c0_11, %14, %c4, %c0_12] : memref<1x20x20x128xbf16, #tpu.memory_space<vmem>>, vector<1x12x16x128xbf16>
    %16 = vector.shape_cast %15 : vector<1x12x16x128xbf16> to vector<12x16x128xbf16>
    %c2_13 = arith.constant 2 : index
    %c0_14 = arith.constant 0 : index
    %c0_15 = arith.constant 0 : index
    %c0_16 = arith.constant 0 : index
    %17 = vector.load %arg7[%c2_13, %c0_14, %c0_15, %c0_16] : memref<3x12x16x128xbf16, #tpu.memory_space<vmem>>, vector<1x12x16x128xbf16>
    %18 = vector.shape_cast %17 : vector<1x12x16x128xbf16> to vector<12x16x128xbf16>
    %19 = vector.shape_cast %16 : vector<12x16x128xbf16> to vector<1x12x16x128xbf16>
    tpu.vector_store %arg7[%c2_13, %c0_14, %c0_15, %c0_16], %19 {strides = array<i32>} : memref<3x12x16x128xbf16, #tpu.memory_space<vmem>>, vector<1x12x16x128xbf16>,
    %c0_17 = arith.constant 0 : index
    %c0_18 = arith.constant 0 : index
    %c0_19 = arith.constant 0 : index
    %c0_20 = arith.constant 0 : index
    %20 = vector.load %arg7[%c0_17, %c0_18, %c0_19, %c0_20] : memref<3x12x16x128xbf16, #tpu.memory_space<vmem>>, vector<1x8x16x128xbf16>
    %21 = vector.shape_cast %20 : vector<1x8x16x128xbf16> to vector<8x16x128xbf16>
    %22 = vector.shape_cast %21 : vector<8x16x128xbf16> to vector<128x128xbf16>
    %c0_21 = arith.constant 0 : index
    %c0_22 = arith.constant 0 : index
    %23 = vector.load %arg8[%c0_21, %c0_22] : memref<128x1152xbf16, #tpu.memory_space<vmem>>, vector<128x128xbf16>
    tpu.vector_store %arg8[%c0_21, %c0_22], %22 {strides = array<i32>} : memref<128x1152xbf16, #tpu.memory_space<vmem>>, vector<128x128xbf16>,
    %c1_23 = arith.constant 1 : index
    %c0_24 = arith.constant 0 : index
    %c0_25 = arith.constant 0 : index
    %c0_26 = arith.constant 0 : index
    %24 = vector.load %arg7[%c1_23, %c0_24, %c0_25, %c0_26] : memref<3x12x16x128xbf16, #tpu.memory_space<vmem>>, vector<1x8x16x128xbf16>
    %25 = vector.shape_cast %24 : vector<1x8x16x128xbf16> to vector<8x16x128xbf16>
    %26 = vector.shape_cast %25 : vector<8x16x128xbf16> to vector<128x128xbf16>
    %c0_27 = arith.constant 0 : index
    %c128 = arith.constant 128 : index
    %27 = vector.load %arg8[%c0_27, %c128] : memref<128x1152xbf16, #tpu.memory_space<vmem>>, vector<128x128xbf16>
    tpu.vector_store %arg8[%c0_27, %c128], %26 {strides = array<i32>} : memref<128x1152xbf16, #tpu.memory_space<vmem>>, vector<128x128xbf16>,
    %c2_28 = arith.constant 2 : index
    %c0_29 = arith.constant 0 : index
    %c0_30 = arith.constant 0 : index
    %c0_31 = arith.constant 0 : index
    %28 = vector.load %arg7[%c2_28, %c0_29, %c0_30, %c0_31] : memref<3x12x16x128xbf16, #tpu.memory_space<vmem>>, vector<1x8x16x128xbf16>
    %29 = vector.shape_cast %28 : vector<1x8x16x128xbf16> to vector<8x16x128xbf16>
    %30 = vector.shape_cast %29 : vector<8x16x128xbf16> to vector<128x128xbf16>
    %c0_32 = arith.constant 0 : index
    %c256 = arith.constant 256 : index
    %31 = vector.load %arg8[%c0_32, %c256] : memref<128x1152xbf16, #tpu.memory_space<vmem>>, vector<128x128xbf16>
    tpu.vector_store %arg8[%c0_32, %c256], %30 {strides = array<i32>} : memref<128x1152xbf16, #tpu.memory_space<vmem>>, vector<128x128xbf16>,
    %c0_33 = arith.constant 0 : index
    %c2_34 = arith.constant 2 : index
    %c0_35 = arith.constant 0 : index
    %c0_36 = arith.constant 0 : index
    %32 = vector.load %arg7[%c0_33, %c2_34, %c0_35, %c0_36] : memref<3x12x16x128xbf16, #tpu.memory_space<vmem>>, vector<1x8x16x128xbf16>
    %33 = vector.shape_cast %32 : vector<1x8x16x128xbf16> to vector<8x16x128xbf16>
    %34 = vector.shape_cast %33 : vector<8x16x128xbf16> to vector<128x128xbf16>
    %c0_37 = arith.constant 0 : index
    %c384 = arith.constant 384 : index
    %35 = vector.load %arg8[%c0_37, %c384] : memref<128x1152xbf16, #tpu.memory_space<vmem>>, vector<128x128xbf16>
    tpu.vector_store %arg8[%c0_37, %c384], %34 {strides = array<i32>} : memref<128x1152xbf16, #tpu.memory_space<vmem>>, vector<128x128xbf16>,
    %c1_38 = arith.constant 1 : index
    %c2_39 = arith.constant 2 : index
    %c0_40 = arith.constant 0 : index
    %c0_41 = arith.constant 0 : index
    %36 = vector.load %arg7[%c1_38, %c2_39, %c0_40, %c0_41] : memref<3x12x16x128xbf16, #tpu.memory_space<vmem>>, vector<1x8x16x128xbf16>
    %37 = vector.shape_cast %36 : vector<1x8x16x128xbf16> to vector<8x16x128xbf16>
    %38 = vector.shape_cast %37 : vector<8x16x128xbf16> to vector<128x128xbf16>
    %c0_42 = arith.constant 0 : index
    %c512 = arith.constant 512 : index
    %39 = vector.load %arg8[%c0_42, %c512] : memref<128x1152xbf16, #tpu.memory_space<vmem>>, vector<128x128xbf16>
    tpu.vector_store %arg8[%c0_42, %c512], %38 {strides = array<i32>} : memref<128x1152xbf16, #tpu.memory_space<vmem>>, vector<128x128xbf16>,
    %c2_43 = arith.constant 2 : index
    %c2_44 = arith.constant 2 : index
    %c0_45 = arith.constant 0 : index
    %c0_46 = arith.constant 0 : index
    %40 = vector.load %arg7[%c2_43, %c2_44, %c0_45, %c0_46] : memref<3x12x16x128xbf16, #tpu.memory_space<vmem>>, vector<1x8x16x128xbf16>
    %41 = vector.shape_cast %40 : vector<1x8x16x128xbf16> to vector<8x16x128xbf16>
    %42 = vector.shape_cast %41 : vector<8x16x128xbf16> to vector<128x128xbf16>
    %c0_47 = arith.constant 0 : index
    %c640 = arith.constant 640 : index
    %43 = vector.load %arg8[%c0_47, %c640] : memref<128x1152xbf16, #tpu.memory_space<vmem>>, vector<128x128xbf16>
    tpu.vector_store %arg8[%c0_47, %c640], %42 {strides = array<i32>} : memref<128x1152xbf16, #tpu.memory_space<vmem>>, vector<128x128xbf16>,
    %c0_48 = arith.constant 0 : index
    %c4_49 = arith.constant 4 : index
    %c0_50 = arith.constant 0 : index
    %c0_51 = arith.constant 0 : index
    %44 = vector.load %arg7[%c0_48, %c4_49, %c0_50, %c0_51] : memref<3x12x16x128xbf16, #tpu.memory_space<vmem>>, vector<1x8x16x128xbf16>
    %45 = vector.shape_cast %44 : vector<1x8x16x128xbf16> to vector<8x16x128xbf16>
    %46 = vector.shape_cast %45 : vector<8x16x128xbf16> to vector<128x128xbf16>
    %c0_52 = arith.constant 0 : index
    %c768 = arith.constant 768 : index
    %47 = vector.load %arg8[%c0_52, %c768] : memref<128x1152xbf16, #tpu.memory_space<vmem>>, vector<128x128xbf16>
    tpu.vector_store %arg8[%c0_52, %c768], %46 {strides = array<i32>} : memref<128x1152xbf16, #tpu.memory_space<vmem>>, vector<128x128xbf16>,
    %c1_53 = arith.constant 1 : index
    %c4_54 = arith.constant 4 : index
    %c0_55 = arith.constant 0 : index
    %c0_56 = arith.constant 0 : index
    %48 = vector.load %arg7[%c1_53, %c4_54, %c0_55, %c0_56] : memref<3x12x16x128xbf16, #tpu.memory_space<vmem>>, vector<1x8x16x128xbf16>
    %49 = vector.shape_cast %48 : vector<1x8x16x128xbf16> to vector<8x16x128xbf16>
    %50 = vector.shape_cast %49 : vector<8x16x128xbf16> to vector<128x128xbf16>
    %c0_57 = arith.constant 0 : index
    %c896 = arith.constant 896 : index
    %51 = vector.load %arg8[%c0_57, %c896] : memref<128x1152xbf16, #tpu.memory_space<vmem>>, vector<128x128xbf16>
    tpu.vector_store %arg8[%c0_57, %c896], %50 {strides = array<i32>} : memref<128x1152xbf16, #tpu.memory_space<vmem>>, vector<128x128xbf16>,
    %c2_58 = arith.constant 2 : index
    %c4_59 = arith.constant 4 : index
    %c0_60 = arith.constant 0 : index
    %c0_61 = arith.constant 0 : index
    %52 = vector.load %arg7[%c2_58, %c4_59, %c0_60, %c0_61] : memref<3x12x16x128xbf16, #tpu.memory_space<vmem>>, vector<1x8x16x128xbf16>
    %53 = vector.shape_cast %52 : vector<1x8x16x128xbf16> to vector<8x16x128xbf16>
    %54 = vector.shape_cast %53 : vector<8x16x128xbf16> to vector<128x128xbf16>
    %c0_62 = arith.constant 0 : index
    %c1024 = arith.constant 1024 : index
    %55 = vector.load %arg8[%c0_62, %c1024] : memref<128x1152xbf16, #tpu.memory_space<vmem>>, vector<128x128xbf16>
    tpu.vector_store %arg8[%c0_62, %c1024], %54 {strides = array<i32>} : memref<128x1152xbf16, #tpu.memory_space<vmem>>, vector<128x128xbf16>,
    %c0_63 = arith.constant 0 : index
    %c0_64 = arith.constant 0 : index
    %56 = vector.load %arg8[%c0_63, %c0_64] : memref<128x1152xbf16, #tpu.memory_space<vmem>>, vector<128x1152xbf16>
    %c0_65 = arith.constant 0 : index
    %c0_66 = arith.constant 0 : index
    %57 = vector.load %arg3[%c0_65, %c0_66] : memref<1152x128xbf16, #tpu.memory_space<vmem>>, vector<1152x128xbf16>
    %cst = arith.constant dense<0.000000e+00> : vector<128x128xf32>
    %58 = tpu.matmul %56, %57, %cst {dimension_numbers = #tpu.dot_dimension_numbers<[1], [0], [0], [1], [0, 0, 1, 1], [], []>} : vector<128x1152xbf16>, vector<1152x128xbf16>, vector<128x128xf32> -> vector<128x128xf32>
    %c0_67 = arith.constant 0 : index
    %c0_68 = arith.constant 0 : index
    %59 = vector.load %arg4[%c0_67, %c0_68] : memref<1x128xf32, #tpu.memory_space<vmem>>, vector<1x128xf32>
    %60 = vector.broadcast %59 : vector<1x128xf32> to vector<128x128xf32>
    %61 = arith.mulf %58, %60 : vector<128x128xf32>
    %c0_69 = arith.constant 0 : index
    %c0_70 = arith.constant 0 : index
    %62 = vector.load %arg5[%c0_69, %c0_70] : memref<1x128xf32, #tpu.memory_space<vmem>>, vector<1x128xf32>
    %63 = vector.broadcast %62 : vector<1x128xf32> to vector<128x128xf32>
    %64 = arith.addf %61, %63 : vector<128x128xf32>
    %cst_71 = arith.constant 0.000000e+00 : f32
    %65 = vector.broadcast %cst_71 : f32 to vector<128x128xf32>
    %66 = arith.maximumf %64, %65 : vector<128x128xf32>
    %67 = vector.shape_cast %66 : vector<128x128xf32> to vector<1x8x16x128xf32>
    %68 = arith.truncf %67 : vector<1x8x16x128xf32> to vector<1x8x16x128xbf16>
    %c0_72 = arith.constant 0 : index
    %c0_73 = arith.constant 0 : index
    %c0_74 = arith.constant 0 : index
    %c0_75 = arith.constant 0 : index
    %69 = vector.load %arg6[%c0_72, %c0_73, %c0_74, %c0_75] : memref<1x8x16x128xbf16, #tpu.memory_space<vmem>>, vector<1x8x16x128xbf16>
    tpu.vector_store %arg6[%c0_72, %c0_73, %c0_74, %c0_75], %68 {strides = array<i32>} : memref<1x8x16x128xbf16, #tpu.memory_space<vmem>>, vector<1x8x16x128xbf16>,
    return
  }
  func.func @transform_0(%arg0: i32, %arg1: i32) -> (i32, i32, i32, i32) {
    %c0_i32 = arith.constant 0 : i32
    %c0_i32_0 = arith.constant 0 : i32
    %c0_i32_1 = arith.constant 0 : i32
    %c0_i32_2 = arith.constant 0 : i32
    return %arg0, %c0_i32, %c0_i32_0, %c0_i32_1 : i32, i32, i32, i32
  }
  func.func @transform_1(%arg0: i32, %arg1: i32) -> (i32, i32) {
    %c0_i32 = arith.constant 0 : i32
    %c0_i32_0 = arith.constant 0 : i32
    %c0_i32_1 = arith.constant 0 : i32
    return %c0_i32, %c0_i32_0 : i32, i32
  }
  func.func @transform_2(%arg0: i32, %arg1: i32) -> (i32, i32) {
    %c0_i32 = arith.constant 0 : i32
    %c0_i32_0 = arith.constant 0 : i32
    %c0_i32_1 = arith.constant 0 : i32
    return %c0_i32, %c0_i32_0 : i32, i32
  }
  func.func @transform_3(%arg0: i32, %arg1: i32) -> (i32, i32) {
    %c0_i32 = arith.constant 0 : i32
    %c0_i32_0 = arith.constant 0 : i32
    %c0_i32_1 = arith.constant 0 : i32
    return %c0_i32, %c0_i32_0 : i32, i32
  }
  func.func @transform_4(%arg0: i32, %arg1: i32) -> (i32, i32, i32, i32) {
    %c0_i32 = arith.constant 0 : i32
    %c0_i32_0 = arith.constant 0 : i32
    %c0_i32_1 = arith.constant 0 : i32
    return %arg0, %arg1, %c0_i32, %c0_i32_0 : i32, i32, i32, i32
  }
}

</mosaic_0001>

<llo_original>
// kernel: tpu_custom_call.1
$region0: #{tpu_custom_call.1}
  #allocation0 [shape = 'u32[]', space=smem, size = 0x4, offset = 0x4, fixed_abs, tag = 'smem constant byte address 0x4 - core index']
  #allocation1 [shape = 'u32[144,128]{1,0:T(1,128)}', space=vmem, size = 0x12000, scoped, tag = 'internal scratch']
  #allocation2 [shape = 'bf16[3,12,16,128]{3,2,1,0:T(16,128)(2,1)}', space=vmem, size = 0x24000, scoped, tag = 'scratch operand']
  #allocation3 [shape = 'bf16[128,1152]{1,0:T(16,128)(2,1)}', space=vmem, size = 0x48000, scoped, tag = 'scratch operand']
  %s0 = inlined_call_operand.vmem [shape: bf16[2,20,20,128], index: 0, kind: input, shape index: {}]
  %s1 = inlined_call_operand.vmem [shape: bf16[1152,128], index: 1, kind: input, shape index: {}]
  %s2 = inlined_call_operand.vmem [shape: f32[1,128], index: 2, kind: input, shape index: {}]
  %s3 = inlined_call_operand.vmem [shape: f32[1,128], index: 3, kind: input, shape index: {}]
  %s4 = inlined_call_operand.hbm [shape: bf16[2,16,16,128], index: 4, kind: output, shape index: {}]
  %s5 = sld [smem:[#allocation0]]
  $region49: #{tpu_custom_call.1} parent=0
    _
  %s7 = ssub.s32 1, %s5
  %s8 = scalar_select 0, %s7, %s5
  $region1: #{tpu_custom_call.1} parent=0
    #allocation4 [shape = 'u8[65536]{0}', space=vmem, size = 0x10000, scoped, tag = 'output window, operand 0']
    #allocation5 [shape = 's32[2]{0}', space=sflag, size = 0x8, scoped, tag = 'scoped memory for tpu_custom_call.1']
    %9 = vsyncpa [#allocation5], 0
    %s10 = scalar_lea.sflag [#allocation5], 1
    %11 = vsyncpa %s10, 0
    loop: start=0, step=1, limit=6
    $region2: #{tpu_custom_call.1} parent=1 // loop_pre_header
      _
    $region3: #{tpu_custom_call.1} parent=1 // loop_header
      %s13 = sphi 0, %s17
      %p14 = scmp.ge.s32.totalorder %s13, 6
      %s20 = sphi 0, %s32
      %s21 = sphi 0, %s28
      %s22 = sphi 0, %s20
      %s23 = sphi 0, %s21
      %s24 = sphi 0, %s22
      %s25 = sphi 0, %s23
      %s35 = sphi 0, %s37
      %s38 = sphi 0, %s35
      %s39 = sphi 0, %s38
      %s55 = sphi 0, %s39
      %s59 = sphi 0, %s59
      %s61 = sphi 0, %s59
      %s62 = sphi 0, %s61
      %s76 = sphi 0, %s62
      %s80 = sphi 0, %s80
      %s82 = sphi 0, %s80
      %s83 = sphi 0, %s82
      %s97 = sphi 0, %s83
      %s101 = sphi 0, %s101
      %s103 = sphi 0, %s101
      %s104 = sphi 0, %s103
      %s118 = sphi 0, %s104
      %s126 = sphi 0, %s128
      %s129 = sphi 0, %s126
      %s130 = sphi 0, %s129
      %s146 = sphi 0, %s130
    $region4: #{tpu_custom_call.1} parent=1 // loop_header_branch
      %16 = sbr.rel (%p14) target = $region8
    $region5: #{tpu_custom_call.1} parent=1 // loop_body
      %s18 = ssub.s32 %s13, 1
      %s19 = ssub.s32 %s13, 2
      %s26 = sadd.s32 1, %s21
      %p27 = scmp.ge.s32.totalorder %s26, 2
      %s28 = scalar_select %p27, 0, %s26
      %s29 = sadd.s32 1, %s20
      %s30 = scalar_select %p27, %s29, %s20
      %p31 = scmp.ge.s32.totalorder %s30, 2
      %s32 = scalar_select %p31, 0, %s30
      %s33 = ssub.s32 %s20, %s32
      %p34 = scmp.eq.s32.totalorder %s33, 0
      %s36 = sadd.s32 %s35, 1
      %s37 = scalar_select %p34, %s35, %s36
      %p40 = pneg %p34
      %p41 = scmp.eq.s32.totalorder %s13, 3
      %p42 = por %p40, %p41
      %p43 = scmp.ne.s32.totalorder %s35, %s38
      %p44 = scmp.eq.s32.totalorder %s13, 0
      %p45 = por %p43, %p44
      %p46 = scmp.ne.s32.totalorder %s35, %s38
      %p47 = scmp.eq.s32.totalorder %s18, 3
      %p48 = por %p46, %p47
      %p49 = scmp.ne.s32.totalorder %s38, %s39
      %p50 = scmp.eq.s32.totalorder %s18, 0
      %p51 = por %p49, %p50
      %p52 = scmp.ne.s32.totalorder %s38, %s39
      %p53 = scmp.eq.s32.totalorder %s19, 3
      %p54 = por %p52, %p53
      %p56 = scmp.ne.s32.totalorder %s39, %s55
      %p57 = scmp.eq.s32.totalorder %s19, 0
      %p58 = por %p56, %p57
      %s60 = sadd.s32 %s59, 1
      %p63 = scmp.eq.s32.totalorder %s13, 3
      %p64 = scmp.ne.s32.totalorder %s59, %s61
      %p65 = scmp.eq.s32.totalorder %s13, 0
      %p66 = por %p64, %p65
      %p67 = scmp.ne.s32.totalorder %s59, %s61
      %p68 = scmp.eq.s32.totalorder %s18, 3
      %p69 = por %p67, %p68
      %p70 = scmp.ne.s32.totalorder %s61, %s62
      %p71 = scmp.eq.s32.totalorder %s18, 0
      %p72 = por %p70, %p71
      %p73 = scmp.ne.s32.totalorder %s61, %s62
      %p74 = scmp.eq.s32.totalorder %s19, 3
      %p75 = por %p73, %p74
      %p77 = scmp.ne.s32.totalorder %s62, %s76
      %p78 = scmp.eq.s32.totalorder %s19, 0
      %p79 = por %p77, %p78
      %s81 = sadd.s32 %s80, 1
      %p84 = scmp.eq.s32.totalorder %s13, 3
      %p85 = scmp.ne.s32.totalorder %s80, %s82
      %p86 = scmp.eq.s32.totalorder %s13, 0
      %p87 = por %p85, %p86
      %p88 = scmp.ne.s32.totalorder %s80, %s82
      %p89 = scmp.eq.s32.totalorder %s18, 3
      %p90 = por %p88, %p89
      %p91 = scmp.ne.s32.totalorder %s82, %s83
      %p92 = scmp.eq.s32.totalorder %s18, 0
      %p93 = por %p91, %p92
      %p94 = scmp.ne.s32.totalorder %s82, %s83
      %p95 = scmp.eq.s32.totalorder %s19, 3
      %p96 = por %p94, %p95
      %p98 = scmp.ne.s32.totalorder %s83, %s97
      %p99 = scmp.eq.s32.totalorder %s19, 0
      %p100 = por %p98, %p99
      %s102 = sadd.s32 %s101, 1
      %p105 = scmp.eq.s32.totalorder %s13, 3
      %p106 = scmp.ne.s32.totalorder %s101, %s103
      %p107 = scmp.eq.s32.totalorder %s13, 0
      %p108 = por %p106, %p107
      %p109 = scmp.ne.s32.totalorder %s101, %s103
      %p110 = scmp.eq.s32.totalorder %s18, 3
      %p111 = por %p109, %p110
      %p112 = scmp.ne.s32.totalorder %s103, %s104
      %p113 = scmp.eq.s32.totalorder %s18, 0
      %p114 = por %p112, %p113
      %p115 = scmp.ne.s32.totalorder %s103, %s104
      %p116 = scmp.eq.s32.totalorder %s19, 3
      %p117 = por %p115, %p116
      %p119 = scmp.ne.s32.totalorder %s104, %s118
      %p120 = scmp.eq.s32.totalorder %s19, 0
      %p121 = por %p119, %p120
      %s122 = ssub.s32 %s20, %s32
      %s123 = ssub.s32 %s21, %s28
      %s124 = sor.u32 %s122, %s123
      %p125 = scmp.eq.s32.totalorder %s124, 0
      %s127 = sadd.s32 %s126, 1
      %s128 = scalar_select %p125, %s126, %s127
      %p131 = pneg %p125
      %p132 = scmp.eq.s32.totalorder %s13, 3
      %p133 = por %p131, %p132
      %p134 = scmp.ne.s32.totalorder %s126, %s129
      %p135 = scmp.eq.s32.totalorder %s13, 0
      %p136 = por %p134, %p135
      %p137 = scmp.ne.s32.totalorder %s126, %s129
      %p138 = scmp.eq.s32.totalorder %s18, 3
      %p139 = por %p137, %p138
      %p140 = scmp.ne.s32.totalorder %s129, %s130
      %p141 = scmp.eq.s32.totalorder %s18, 0
      %p142 = por %p140, %p141
      %p143 = scmp.ne.s32.totalorder %s129, %s130
      %p144 = scmp.eq.s32.totalorder %s19, 3
      %p145 = por %p143, %p144
      %p147 = scmp.ne.s32.totalorder %s130, %s146
      %p148 = scmp.eq.s32.totalorder %s19, 0
      %p149 = por %p147, %p148
      %p150 = scmp.le.s32.totalorder 1, %s13
      %p151 = scmp.lt.s32.totalorder %s13, 5
      %p152 = pnand %p150, %p151
      %p153 = pneg %p152
      // Predicated region
      $region9: #{tpu_custom_call.1} parent=5 // pred_check
        _
      $region10: #{tpu_custom_call.1} parent=5 // pred_check_branch
        %155 = sbr.rel (%p152) target = $region12
      $region11: #{tpu_custom_call.1} parent=5 // pred_region
        %s156 = ssub.s32 %s13, 1
        // Predicated region
        $region13: #{tpu_custom_call.1} parent=11 // pred_check
          %p157 = pneg %p72
        $region14: #{tpu_custom_call.1} parent=11 // pred_check_branch
          %159 = sbr.rel (%p157) target = $region16
        $region15: #{tpu_custom_call.1} parent=11 // pred_region
          _
        $region16: #{tpu_custom_call.1} parent=11 // pred_fallthru
          _
        // Predicated region
        $region17: #{tpu_custom_call.1} parent=11 // pred_check
          %p160 = pneg %p93
        $region18: #{tpu_custom_call.1} parent=11 // pred_check_branch
          %162 = sbr.rel (%p160) target = $region20
        $region19: #{tpu_custom_call.1} parent=11 // pred_region
          _
        $region20: #{tpu_custom_call.1} parent=11 // pred_fallthru
          _
        // Predicated region
        $region21: #{tpu_custom_call.1} parent=11 // pred_check
          %p163 = pneg %p114
        $region22: #{tpu_custom_call.1} parent=11 // pred_check_branch
          %165 = sbr.rel (%p163) target = $region24
        $region23: #{tpu_custom_call.1} parent=11 // pred_region
          _
        $region24: #{tpu_custom_call.1} parent=11 // pred_fallthru
          _
      $region12: #{tpu_custom_call.1} parent=5 // pred_fallthru
        _
      %p166 = scmp.lt.s32.totalorder %s13, 4
      // Predicated region
      $region25: #{tpu_custom_call.1} parent=5 // pred_check
        %p167 = pneg %p166
      $region26: #{tpu_custom_call.1} parent=5 // pred_check_branch
        %169 = sbr.rel (%p167) target = $region28
      $region27: #{tpu_custom_call.1} parent=5 // pred_region
        // Predicated region
        $region29: #{tpu_custom_call.1} parent=27 // pred_check
          %p170 = pneg %p45
        $region30: #{tpu_custom_call.1} parent=27 // pred_check_branch
          %172 = sbr.rel (%p170) target = $region32
        $region31: #{tpu_custom_call.1} parent=27 // pred_region
          %p173 = scmp.lt.s32.totalorder %s20, 1
          %s174 = scalar_select %p173, %s20, 1
          %s175 = smul.addr %s174, 60
          %s176 = smul.addr %s175, 4
          %s177 = scalar_lea.vmem %s0, %s176
        $region32: #{tpu_custom_call.1} parent=27 // pred_fallthru
          _
      $region28: #{tpu_custom_call.1} parent=5 // pred_fallthru
        _
      %p178 = scmp.le.s32.totalorder 1, %s13
      %p179 = scmp.lt.s32.totalorder %s13, 5
      %p180 = pnand %p178, %p179
      %p181 = pneg %p180
      // Predicated region
      $region33: #{tpu_custom_call.1} parent=5 // pred_check
        _
      $region34: #{tpu_custom_call.1} parent=5 // pred_check_branch
        %183 = sbr.rel (%p180) target = $region36
      $region35: #{tpu_custom_call.1} parent=5 // pred_region
        %s184 = ssub.s32 %s13, 1
        %p185 = scmp.lt.s32.totalorder %s22, 1
        %s186 = scalar_select %p185, %s22, 1
        %s187 = smul.addr %s186, 60
        %s188 = smul.addr %s187, 4
        %s189 = scalar_lea.vmem %s0, %s188
        %p190 = pneg %p51
        %p191 = pneg %p48
        %p192 = pneg %p72
        %p193 = pneg %p69
        %p194 = pneg %p93
        %p195 = pneg %p90
        %p196 = pneg %p114
        %p197 = pneg %p111
        %p198 = pneg %p142
        %p199 = pneg %p139
        %s200 = sand.u32 %s129, 1
        %s201 = scalar_lea.sflag [#allocation5], %s200
        %s202 = sand.u32 %s129, 1
        %s203 = smul.addr %s202, 64
        %s204 = scalar_lea.vmem [#allocation4], %s203
        %p205 = scmp.lt.s32.totalorder %s22, 1
        %s206 = scalar_select %p205, %s22, 1
        %s207 = smul.addr %s206, 60
        %s208 = smul.addr %s207, 4
        %s209 = scalar_lea.vmem %s0, %s208
        %s210 = smul.u32 8, %s23
        %s212 = smul.u32 %s23, 8
        %s213 = smul.u32 %s212, 3
        %s214 = smul.addr %s213, 4
        %s215 = scalar_lea.vmem %s209, %s214
        %v216 = vld [vmem:[%s215] sm:$0xf]
        %v217 = vld [vmem:[%s215 + $0x4] sm:$0xf]
        %v218 = vld [vmem:[%s215 + $0xc] sm:$0xf]
        %v219 = vld [vmem:[%s215 + $0x10] sm:$0xf]
        %v220 = vld [vmem:[%s215 + $0x18] sm:$0xf]
        %v221 = vld [vmem:[%s215 + $0x1c] sm:$0xf]
        %v222 = vld [vmem:[%s215 + $0x24] sm:$0xf]
        %v223 = vld [vmem:[%s215 + $0x28] sm:$0xf]
        %v224 = vld [vmem:[%s215 + $0x30] sm:$0xf]
        %v225 = vld [vmem:[%s215 + $0x34] sm:$0xf]
        %v226 = vld [vmem:[%s215 + $0x3c] sm:$0xf]
        %v227 = vld [vmem:[%s215 + $0x40] sm:$0xf]
        %v228 = vld [vmem:[%s215 + $0x48] sm:$0xf]
        %v229 = vld [vmem:[%s215 + $0x4c] sm:$0xf]
        %v230 = vld [vmem:[%s215 + $0x54] sm:$0xf]
        %v231 = vld [vmem:[%s215 + $0x58] sm:$0xf]
        %v232 = vld [vmem:[%s215 + $0x60] sm:$0xf]
        %v233 = vld [vmem:[%s215 + $0x64] sm:$0xf]
        %v234 = vld [vmem:[%s215 + $0x6c] sm:$0xf]
        %v235 = vld [vmem:[%s215 + $0x70] sm:$0xf]
        %v236 = vld [vmem:[%s215 + $0x78] sm:$0xf]
        %v237 = vld [vmem:[%s215 + $0x7c] sm:$0xf]
        %v238 = vld [vmem:[%s215 + $0x84] sm:$0xf]
        %v239 = vld [vmem:[%s215 + $0x88] sm:$0xf]
        %v264 = vunpack.c.l.b16 %v216
        %v265 = vunpack.c.l.b16 %v217
        %v266 = vunpack.c.l.b16 %v218
        %v267 = vunpack.c.l.b16 %v219
        %v268 = vunpack.c.l.b16 %v220
        %v269 = vunpack.c.l.b16 %v221
        %v270 = vunpack.c.l.b16 %v222
        %v271 = vunpack.c.l.b16 %v223
        %v272 = vunpack.c.l.b16 %v224
        %v273 = vunpack.c.l.b16 %v225
        %v274 = vunpack.c.l.b16 %v226
        %v275 = vunpack.c.l.b16 %v227
        %v276 = vunpack.c.l.b16 %v228
        %v277 = vunpack.c.l.b16 %v229
        %v278 = vunpack.c.l.b16 %v230
        %v279 = vunpack.c.l.b16 %v231
        %v280 = vunpack.c.l.b16 %v232
        %v281 = vunpack.c.l.b16 %v233
        %v282 = vunpack.c.l.b16 %v234
        %v283 = vunpack.c.l.b16 %v235
        %v284 = vunpack.c.l.b16 %v236
        %v285 = vunpack.c.l.b16 %v237
        %v286 = vunpack.c.l.b16 %v238
        %v287 = vunpack.c.l.b16 %v239
        %v288 = vpack.c.b16 %v265, %v264
        %v289 = vpack.c.b16 %v267, %v266
        %v290 = vpack.c.b16 %v269, %v268
        %v291 = vpack.c.b16 %v271, %v270
        %v292 = vpack.c.b16 %v273, %v272
        %v293 = vpack.c.b16 %v275, %v274
        %v294 = vpack.c.b16 %v277, %v276
        %v295 = vpack.c.b16 %v279, %v278
        %v296 = vpack.c.b16 %v281, %v280
        %v297 = vpack.c.b16 %v283, %v282
        %v298 = vpack.c.b16 %v285, %v284
        %v299 = vpack.c.b16 %v287, %v286
        %312 = vst [vmem:[#allocation2] sm:$0xff] %v288
        %313 = vst [vmem:[#allocation2 + $0x8] sm:$0xff] %v289
        %314 = vst [vmem:[#allocation2 + $0x10] sm:$0xff] %v290
        %315 = vst [vmem:[#allocation2 + $0x18] sm:$0xff] %v291
        %316 = vst [vmem:[#allocation2 + $0x20] sm:$0xff] %v292
        %317 = vst [vmem:[#allocation2 + $0x28] sm:$0xff] %v293
        %318 = vst [vmem:[#allocation2 + $0x30] sm:$0xff] %v294
        %319 = vst [vmem:[#allocation2 + $0x38] sm:$0xff] %v295
        %320 = vst [vmem:[#allocation2 + $0x40] sm:$0xff] %v296
        %321 = vst [vmem:[#allocation2 + $0x48] sm:$0xff] %v297
        %322 = vst [vmem:[#allocation2 + $0x50] sm:$0xff] %v298
        %323 = vst [vmem:[#allocation2 + $0x58] sm:$0xff] %v299
        %v324 = vld [vmem:[%s215] sm:$0xe]
        %v325 = vld [vmem:[%s215 + $0x4] sm:$0xf]
        %v326 = vld [vmem:[%s215 + $0x8] sm:$0x1]
        %v327 = vld [vmem:[%s215 + $0xc] sm:$0xe]
        %v328 = vld [vmem:[%s215 + $0x10] sm:$0xf]
        %v329 = vld [vmem:[%s215 + $0x14] sm:$0x1]
        %v330 = vld [vmem:[%s215 + $0x18] sm:$0xe]
        %v331 = vld [vmem:[%s215 + $0x1c] sm:$0xf]
        %v332 = vld [vmem:[%s215 + $0x20] sm:$0x1]
        %v333 = vld [vmem:[%s215 + $0x24] sm:$0xe]
        %v334 = vld [vmem:[%s215 + $0x28] sm:$0xf]
        %v335 = vld [vmem:[%s215 + $0x2c] sm:$0x1]
        %v336 = vld [vmem:[%s215 + $0x30] sm:$0xe]
        %v337 = vld [vmem:[%s215 + $0x34] sm:$0xf]
        %v338 = vld [vmem:[%s215 + $0x38] sm:$0x1]
        %v339 = vld [vmem:[%s215 + $0x3c] sm:$0xe]
        %v340 = vld [vmem:[%s215 + $0x40] sm:$0xf]
        %v341 = vld [vmem:[%s215 + $0x44] sm:$0x1]
        %v342 = vld [vmem:[%s215 + $0x48] sm:$0xe]
        %v343 = vld [vmem:[%s215 + $0x4c] sm:$0xf]
        %v344 = vld [vmem:[%s215 + $0x50] sm:$0x1]
        %v345 = vld [vmem:[%s215 + $0x54] sm:$0xe]
        %v346 = vld [vmem:[%s215 + $0x58] sm:$0xf]
        %v347 = vld [vmem:[%s215 + $0x5c] sm:$0x1]
        %v348 = vld [vmem:[%s215 + $0x60] sm:$0xe]
        %v349 = vld [vmem:[%s215 + $0x64] sm:$0xf]
        %v350 = vld [vmem:[%s215 + $0x68] sm:$0x1]
        %v351 = vld [vmem:[%s215 + $0x6c] sm:$0xe]
        %v352 = vld [vmem:[%s215 + $0x70] sm:$0xf]
        %v353 = vld [vmem:[%s215 + $0x74] sm:$0x1]
        %v354 = vld [vmem:[%s215 + $0x78] sm:$0xe]
        %v355 = vld [vmem:[%s215 + $0x7c] sm:$0xf]
        %v356 = vld [vmem:[%s215 + $0x80] sm:$0x1]
        %v357 = vld [vmem:[%s215 + $0x84] sm:$0xe]
        %v358 = vld [vmem:[%s215 + $0x88] sm:$0xf]
        %v359 = vld [vmem:[%s215 + $0x8c] sm:$0x1]
        %v396 = vunpack.c.l.b16 %v324
        %v397 = vunpack.c.l.b16 %v325
        %v398 = vunpack.c.l.b16 %v326
        %v399 = vunpack.c.l.b16 %v327
        %v400 = vunpack.c.l.b16 %v328
        %v401 = vunpack.c.l.b16 %v329
        %v402 = vunpack.c.l.b16 %v330
        %v403 = vunpack.c.l.b16 %v331
        %v404 = vunpack.c.l.b16 %v332
        %v405 = vunpack.c.l.b16 %v333
        %v406 = vunpack.c.l.b16 %v334
        %v407 = vunpack.c.l.b16 %v335
        %v408 = vunpack.c.l.b16 %v336
        %v409 = vunpack.c.l.b16 %v337
        %v410 = vunpack.c.l.b16 %v338
        %v411 = vunpack.c.l.b16 %v339
        %v412 = vunpack.c.l.b16 %v340
        %v413 = vunpack.c.l.b16 %v341
        %v414 = vunpack.c.l.b16 %v342
        %v415 = vunpack.c.l.b16 %v343
        %v416 = vunpack.c.l.b16 %v344
        %v417 = vunpack.c.l.b16 %v345
        %v418 = vunpack.c.l.b16 %v346
        %v419 = vunpack.c.l.b16 %v347
        %v420 = vunpack.c.l.b16 %v348
        %v421 = vunpack.c.l.b16 %v349
        %v422 = vunpack.c.l.b16 %v350
        %v423 = vunpack.c.l.b16 %v351
        %v424 = vunpack.c.l.b16 %v352
        %v425 = vunpack.c.l.b16 %v353
        %v426 = vunpack.c.l.b16 %v354
        %v427 = vunpack.c.l.b16 %v355
        %v428 = vunpack.c.l.b16 %v356
        %v429 = vunpack.c.l.b16 %v357
        %v430 = vunpack.c.l.b16 %v358
        %v431 = vunpack.c.l.b16 %v359
        %v432 = vpack.c.b16 %v397, %v396
        %v433 = vpack.c.b16 %v398, %v398
        %v434 = vpack.c.b16 %v400, %v399
        %v435 = vpack.c.b16 %v401, %v401
        %v436 = vpack.c.b16 %v403, %v402
        %v437 = vpack.c.b16 %v404, %v404
        %v438 = vpack.c.b16 %v406, %v405
        %v439 = vpack.c.b16 %v407, %v407
        %v440 = vpack.c.b16 %v409, %v408
        %v441 = vpack.c.b16 %v410, %v410
        %v442 = vpack.c.b16 %v412, %v411
        %v443 = vpack.c.b16 %v413, %v413
        %v444 = vpack.c.b16 %v415, %v414
        %v445 = vpack.c.b16 %v416, %v416
        %v446 = vpack.c.b16 %v418, %v417
        %v447 = vpack.c.b16 %v419, %v419
        %v448 = vpack.c.b16 %v421, %v420
        %v449 = vpack.c.b16 %v422, %v422
        %v450 = vpack.c.b16 %v424, %v423
        %v451 = vpack.c.b16 %v425, %v425
        %v452 = vpack.c.b16 %v427, %v426
        %v453 = vpack.c.b16 %v428, %v428
        %v454 = vpack.c.b16 %v430, %v429
        %v455 = vpack.c.b16 %v431, %v431
        %vm456 = vcmask 1046528
        %v457 = vrot.slane %v432, 1
        %v458 = vrot.slane %v433, 1
        %v459 = vsel %vm456, %v457, %v458
        %v460 = vrot.slane %v434, 1
        %v461 = vrot.slane %v435, 1
        %v462 = vsel %vm456, %v460, %v461
        %v463 = vrot.slane %v436, 1
        %v464 = vrot.slane %v437, 1
        %v465 = vsel %vm456, %v463, %v464
        %v466 = vrot.slane %v438, 1
        %v467 = vrot.slane %v439, 1
        %v468 = vsel %vm456, %v466, %v467
        %v469 = vrot.slane %v440, 1
        %v470 = vrot.slane %v441, 1
        %v471 = vsel %vm456, %v469, %v470
        %v472 = vrot.slane %v442, 1
        %v473 = vrot.slane %v443, 1
        %v474 = vsel %vm456, %v472, %v473
        %v475 = vrot.slane %v444, 1
        %v476 = vrot.slane %v445, 1
        %v477 = vsel %vm456, %v475, %v476
        %v478 = vrot.slane %v446, 1
        %v479 = vrot.slane %v447, 1
        %v480 = vsel %vm456, %v478, %v479
        %v481 = vrot.slane %v448, 1
        %v482 = vrot.slane %v449, 1
        %v483 = vsel %vm456, %v481, %v482
        %v484 = vrot.slane %v450, 1
        %v485 = vrot.slane %v451, 1
        %v486 = vsel %vm456, %v484, %v485
        %v487 = vrot.slane %v452, 1
        %v488 = vrot.slane %v453, 1
        %v489 = vsel %vm456, %v487, %v488
        %v490 = vrot.slane %v454, 1
        %v491 = vrot.slane %v455, 1
        %v492 = vsel %vm456, %v490, %v491
        %s505 = scalar_lea.vmem [#allocation2], 96
        %506 = vst [vmem:[%s505] sm:$0xff] %v459
        %507 = vst [vmem:[%s505 + $0x8] sm:$0xff] %v462
        %508 = vst [vmem:[%s505 + $0x10] sm:$0xff] %v465
        %509 = vst [vmem:[%s505 + $0x18] sm:$0xff] %v468
        %510 = vst [vmem:[%s505 + $0x20] sm:$0xff] %v471
        %511 = vst [vmem:[%s505 + $0x28] sm:$0xff] %v474
        %512 = vst [vmem:[%s505 + $0x30] sm:$0xff] %v477
        %513 = vst [vmem:[%s505 + $0x38] sm:$0xff] %v480
        %514 = vst [vmem:[%s505 + $0x40] sm:$0xff] %v483
        %515 = vst [vmem:[%s505 + $0x48] sm:$0xff] %v486
        %516 = vst [vmem:[%s505 + $0x50] sm:$0xff] %v489
        %517 = vst [vmem:[%s505 + $0x58] sm:$0xff] %v492
        %v518 = vld [vmem:[%s215] sm:$0xc]
        %v519 = vld [vmem:[%s215 + $0x4] sm:$0xf]
        %v520 = vld [vmem:[%s215 + $0x8] sm:$0x3]
        %v521 = vld [vmem:[%s215 + $0xc] sm:$0xc]
        %v522 = vld [vmem:[%s215 + $0x10] sm:$0xf]
        %v523 = vld [vmem:[%s215 + $0x14] sm:$0x3]
        %v524 = vld [vmem:[%s215 + $0x18] sm:$0xc]
        %v525 = vld [vmem:[%s215 + $0x1c] sm:$0xf]
        %v526 = vld [vmem:[%s215 + $0x20] sm:$0x3]
        %v527 = vld [vmem:[%s215 + $0x24] sm:$0xc]
        %v528 = vld [vmem:[%s215 + $0x28] sm:$0xf]
        %v529 = vld [vmem:[%s215 + $0x2c] sm:$0x3]
        %v530 = vld [vmem:[%s215 + $0x30] sm:$0xc]
        %v531 = vld [vmem:[%s215 + $0x34] sm:$0xf]
        %v532 = vld [vmem:[%s215 + $0x38] sm:$0x3]
        %v533 = vld [vmem:[%s215 + $0x3c] sm:$0xc]
        %v534 = vld [vmem:[%s215 + $0x40] sm:$0xf]
        %v535 = vld [vmem:[%s215 + $0x44] sm:$0x3]
        %v536 = vld [vmem:[%s215 + $0x48] sm:$0xc]
        %v537 = vld [vmem:[%s215 + $0x4c] sm:$0xf]
        %v538 = vld [vmem:[%s215 + $0x50] sm:$0x3]
        %v539 = vld [vmem:[%s215 + $0x54] sm:$0xc]
        %v540 = vld [vmem:[%s215 + $0x58] sm:$0xf]
        %v541 = vld [vmem:[%s215 + $0x5c] sm:$0x3]
        %v542 = vld [vmem:[%s215 + $0x60] sm:$0xc]
        %v543 = vld [vmem:[%s215 + $0x64] sm:$0xf]
        %v544 = vld [vmem:[%s215 + $0x68] sm:$0x3]
        %v545 = vld [vmem:[%s215 + $0x6c] sm:$0xc]
        %v546 = vld [vmem:[%s215 + $0x70] sm:$0xf]
        %v547 = vld [vmem:[%s215 + $0x74] sm:$0x3]
        %v548 = vld [vmem:[%s215 + $0x78] sm:$0xc]
        %v549 = vld [vmem:[%s215 + $0x7c] sm:$0xf]
        %v550 = vld [vmem:[%s215 + $0x80] sm:$0x3]
        %v551 = vld [vmem:[%s215 + $0x84] sm:$0xc]
        %v552 = vld [vmem:[%s215 + $0x88] sm:$0xf]
        %v553 = vld [vmem:[%s215 + $0x8c] sm:$0x3]
        %v590 = vunpack.c.l.b16 %v518
        %v591 = vunpack.c.l.b16 %v519
        %v592 = vunpack.c.l.b16 %v520
        %v593 = vunpack.c.l.b16 %v521
        %v594 = vunpack.c.l.b16 %v522
        %v595 = vunpack.c.l.b16 %v523
        %v596 = vunpack.c.l.b16 %v524
        %v597 = vunpack.c.l.b16 %v525
        %v598 = vunpack.c.l.b16 %v526
        %v599 = vunpack.c.l.b16 %v527
        %v600 = vunpack.c.l.b16 %v528
        %v601 = vunpack.c.l.b16 %v529
        %v602 = vunpack.c.l.b16 %v530
        %v603 = vunpack.c.l.b16 %v531
        %v604 = vunpack.c.l.b16 %v532
        %v605 = vunpack.c.l.b16 %v533
        %v606 = vunpack.c.l.b16 %v534
        %v607 = vunpack.c.l.b16 %v535
        %v608 = vunpack.c.l.b16 %v536
        %v609 = vunpack.c.l.b16 %v537
        %v610 = vunpack.c.l.b16 %v538
        %v611 = vunpack.c.l.b16 %v539
        %v612 = vunpack.c.l.b16 %v540
        %v613 = vunpack.c.l.b16 %v541
        %v614 = vunpack.c.l.b16 %v542
        %v615 = vunpack.c.l.b16 %v543
        %v616 = vunpack.c.l.b16 %v544
        %v617 = vunpack.c.l.b16 %v545
        %v618 = vunpack.c.l.b16 %v546
        %v619 = vunpack.c.l.b16 %v547
        %v620 = vunpack.c.l.b16 %v548
        %v621 = vunpack.c.l.b16 %v549
        %v622 = vunpack.c.l.b16 %v550
        %v623 = vunpack.c.l.b16 %v551
        %v624 = vunpack.c.l.b16 %v552
        %v625 = vunpack.c.l.b16 %v553
        %v626 = vpack.c.b16 %v591, %v590
        %v627 = vpack.c.b16 %v592, %v592
        %v628 = vpack.c.b16 %v594, %v593
        %v629 = vpack.c.b16 %v595, %v595
        %v630 = vpack.c.b16 %v597, %v596
        %v631 = vpack.c.b16 %v598, %v598
        %v632 = vpack.c.b16 %v600, %v599
        %v633 = vpack.c.b16 %v601, %v601
        %v634 = vpack.c.b16 %v603, %v602
        %v635 = vpack.c.b16 %v604, %v604
        %v636 = vpack.c.b16 %v606, %v605
        %v637 = vpack.c.b16 %v607, %v607
        %v638 = vpack.c.b16 %v609, %v608
        %v639 = vpack.c.b16 %v610, %v610
        %v640 = vpack.c.b16 %v612, %v611
        %v641 = vpack.c.b16 %v613, %v613
        %v642 = vpack.c.b16 %v615, %v614
        %v643 = vpack.c.b16 %v616, %v616
        %v644 = vpack.c.b16 %v618, %v617
        %v645 = vpack.c.b16 %v619, %v619
        %v646 = vpack.c.b16 %v621, %v620
        %v647 = vpack.c.b16 %v622, %v622
        %v648 = vpack.c.b16 %v624, %v623
        %v649 = vpack.c.b16 %v625, %v625
        %vm650 = vcmask 1045504
        %v651 = vrot.slane %v626, 2
        %v652 = vrot.slane %v627, 2
        %v653 = vsel %vm650, %v651, %v652
        %v654 = vrot.slane %v628, 2
        %v655 = vrot.slane %v629, 2
        %v656 = vsel %vm650, %v654, %v655
        %v657 = vrot.slane %v630, 2
        %v658 = vrot.slane %v631, 2
        %v659 = vsel %vm650, %v657, %v658
        %v660 = vrot.slane %v632, 2
        %v661 = vrot.slane %v633, 2
        %v662 = vsel %vm650, %v660, %v661
        %v663 = vrot.slane %v634, 2
        %v664 = vrot.slane %v635, 2
        %v665 = vsel %vm650, %v663, %v664
        %v666 = vrot.slane %v636, 2
        %v667 = vrot.slane %v637, 2
        %v668 = vsel %vm650, %v666, %v667
        %v669 = vrot.slane %v638, 2
        %v670 = vrot.slane %v639, 2
        %v671 = vsel %vm650, %v669, %v670
        %v672 = vrot.slane %v640, 2
        %v673 = vrot.slane %v641, 2
        %v674 = vsel %vm650, %v672, %v673
        %v675 = vrot.slane %v642, 2
        %v676 = vrot.slane %v643, 2
        %v677 = vsel %vm650, %v675, %v676
        %v678 = vrot.slane %v644, 2
        %v679 = vrot.slane %v645, 2
        %v680 = vsel %vm650, %v678, %v679
        %v681 = vrot.slane %v646, 2
        %v682 = vrot.slane %v647, 2
        %v683 = vsel %vm650, %v681, %v682
        %v684 = vrot.slane %v648, 2
        %v685 = vrot.slane %v649, 2
        %v686 = vsel %vm650, %v684, %v685
        %s699 = scalar_lea.vmem [#allocation2], 192
        %700 = vst [vmem:[%s699] sm:$0xff] %v653
        %701 = vst [vmem:[%s699 + $0x8] sm:$0xff] %v656
        %702 = vst [vmem:[%s699 + $0x10] sm:$0xff] %v659
        %703 = vst [vmem:[%s699 + $0x18] sm:$0xff] %v662
        %704 = vst [vmem:[%s699 + $0x20] sm:$0xff] %v665
        %705 = vst [vmem:[%s699 + $0x28] sm:$0xff] %v668
        %706 = vst [vmem:[%s699 + $0x30] sm:$0xff] %v671
        %707 = vst [vmem:[%s699 + $0x38] sm:$0xff] %v674
        %708 = vst [vmem:[%s699 + $0x40] sm:$0xff] %v677
        %709 = vst [vmem:[%s699 + $0x48] sm:$0xff] %v680
        %710 = vst [vmem:[%s699 + $0x50] sm:$0xff] %v683
        %711 = vst [vmem:[%s699 + $0x58] sm:$0xff] %v686
        %v712 = vld [vmem:[#allocation2] sm:$0xff]
        %v713 = vld [vmem:[#allocation2 + $0x8] sm:$0xff]
        %v714 = vld [vmem:[#allocation2 + $0x10] sm:$0xff]
        %v715 = vld [vmem:[#allocation2 + $0x18] sm:$0xff]
        %v716 = vld [vmem:[#allocation2 + $0x20] sm:$0xff]
        %v717 = vld [vmem:[#allocation2 + $0x28] sm:$0xff]
        %v718 = vld [vmem:[#allocation2 + $0x30] sm:$0xff]
        %v719 = vld [vmem:[#allocation2 + $0x38] sm:$0xff]
        %720 = vst [vmem:[#allocation3] sm:$0xff] %v712
        %721 = vst [vmem:[#allocation3 + $0x48] sm:$0xff] %v713
        %722 = vst [vmem:[#allocation3 + $0x90] sm:$0xff] %v714
        %723 = vst [vmem:[#allocation3 + $0xd8] sm:$0xff] %v715
        %724 = vst [vmem:[#allocation3 + $0x120] sm:$0xff] %v716
        %725 = vst [vmem:[#allocation3 + $0x168] sm:$0xff] %v717
        %726 = vst [vmem:[#allocation3 + $0x1b0] sm:$0xff] %v718
        %727 = vst [vmem:[#allocation3 + $0x1f8] sm:$0xff] %v719
        %v728 = vld [vmem:[%s505] sm:$0xff]
        %v729 = vld [vmem:[%s505 + $0x8] sm:$0xff]
        %v730 = vld [vmem:[%s505 + $0x10] sm:$0xff]
        %v731 = vld [vmem:[%s505 + $0x18] sm:$0xff]
        %v732 = vld [vmem:[%s505 + $0x20] sm:$0xff]
        %v733 = vld [vmem:[%s505 + $0x28] sm:$0xff]
        %v734 = vld [vmem:[%s505 + $0x30] sm:$0xff]
        %v735 = vld [vmem:[%s505 + $0x38] sm:$0xff]
        %736 = vst [vmem:[#allocation3 + $0x8] sm:$0xff] %v728
        %737 = vst [vmem:[#allocation3 + $0x50] sm:$0xff] %v729
        %738 = vst [vmem:[#allocation3 + $0x98] sm:$0xff] %v730
        %739 = vst [vmem:[#allocation3 + $0xe0] sm:$0xff] %v731
        %740 = vst [vmem:[#allocation3 + $0x128] sm:$0xff] %v732
        %741 = vst [vmem:[#allocation3 + $0x170] sm:$0xff] %v733
        %742 = vst [vmem:[#allocation3 + $0x1b8] sm:$0xff] %v734
        %743 = vst [vmem:[#allocation3 + $0x200] sm:$0xff] %v735
        %v744 = vld [vmem:[%s699] sm:$0xff]
        %v745 = vld [vmem:[%s699 + $0x8] sm:$0xff]
        %v746 = vld [vmem:[%s699 + $0x10] sm:$0xff]
        %v747 = vld [vmem:[%s699 + $0x18] sm:$0xff]
        %v748 = vld [vmem:[%s699 + $0x20] sm:$0xff]
        %v749 = vld [vmem:[%s699 + $0x28] sm:$0xff]
        %v750 = vld [vmem:[%s699 + $0x30] sm:$0xff]
        %v751 = vld [vmem:[%s699 + $0x38] sm:$0xff]
        %752 = vst [vmem:[#allocation3 + $0x10] sm:$0xff] %v744
        %753 = vst [vmem:[#allocation3 + $0x58] sm:$0xff] %v745
        %754 = vst [vmem:[#allocation3 + $0xa0] sm:$0xff] %v746
        %755 = vst [vmem:[#allocation3 + $0xe8] sm:$0xff] %v747
        %756 = vst [vmem:[#allocation3 + $0x130] sm:$0xff] %v748
        %757 = vst [vmem:[#allocation3 + $0x178] sm:$0xff] %v749
        %758 = vst [vmem:[#allocation3 + $0x1c0] sm:$0xff] %v750
        %759 = vst [vmem:[#allocation3 + $0x208] sm:$0xff] %v751
        %s760 = scalar_lea.vmem [#allocation2], 16
        %v761 = vld [vmem:[%s760] sm:$0xff]
        %v762 = vld [vmem:[%s760 + $0x8] sm:$0xff]
        %v763 = vld [vmem:[%s760 + $0x10] sm:$0xff]
        %v764 = vld [vmem:[%s760 + $0x18] sm:$0xff]
        %v765 = vld [vmem:[%s760 + $0x20] sm:$0xff]
        %v766 = vld [vmem:[%s760 + $0x28] sm:$0xff]
        %v767 = vld [vmem:[%s760 + $0x30] sm:$0xff]
        %v768 = vld [vmem:[%s760 + $0x38] sm:$0xff]
        %769 = vst [vmem:[#allocation3 + $0x18] sm:$0xff] %v761
        %770 = vst [vmem:[#allocation3 + $0x60] sm:$0xff] %v762
        %771 = vst [vmem:[#allocation3 + $0xa8] sm:$0xff] %v763
        %772 = vst [vmem:[#allocation3 + $0xf0] sm:$0xff] %v764
        %773 = vst [vmem:[#allocation3 + $0x138] sm:$0xff] %v765
        %774 = vst [vmem:[#allocation3 + $0x180] sm:$0xff] %v766
        %775 = vst [vmem:[#allocation3 + $0x1c8] sm:$0xff] %v767
        %776 = vst [vmem:[#allocation3 + $0x210] sm:$0xff] %v768
        %s777 = scalar_lea.vmem [#allocation2], 112
        %v778 = vld [vmem:[%s777] sm:$0xff]
        %v779 = vld [vmem:[%s777 + $0x8] sm:$0xff]
        %v780 = vld [vmem:[%s777 + $0x10] sm:$0xff]
        %v781 = vld [vmem:[%s777 + $0x18] sm:$0xff]
        %v782 = vld [vmem:[%s777 + $0x20] sm:$0xff]
        %v783 = vld [vmem:[%s777 + $0x28] sm:$0xff]
        %v784 = vld [vmem:[%s777 + $0x30] sm:$0xff]
        %v785 = vld [vmem:[%s777 + $0x38] sm:$0xff]
        %786 = vst [vmem:[#allocation3 + $0x20] sm:$0xff] %v778
        %787 = vst [vmem:[#allocation3 + $0x68] sm:$0xff] %v779
        %788 = vst [vmem:[#allocation3 + $0xb0] sm:$0xff] %v780
        %789 = vst [vmem:[#allocation3 + $0xf8] sm:$0xff] %v781
        %790 = vst [vmem:[#allocation3 + $0x140] sm:$0xff] %v782
        %791 = vst [vmem:[#allocation3 + $0x188] sm:$0xff] %v783
        %792 = vst [vmem:[#allocation3 + $0x1d0] sm:$0xff] %v784
        %793 = vst [vmem:[#allocation3 + $0x218] sm:$0xff] %v785
        %s794 = scalar_lea.vmem [#allocation2], 208
        %v795 = vld [vmem:[%s794] sm:$0xff]
        %v796 = vld [vmem:[%s794 + $0x8] sm:$0xff]
        %v797 = vld [vmem:[%s794 + $0x10] sm:$0xff]
        %v798 = vld [vmem:[%s794 + $0x18] sm:$0xff]
        %v799 = vld [vmem:[%s794 + $0x20] sm:$0xff]
        %v800 = vld [vmem:[%s794 + $0x28] sm:$0xff]
        %v801 = vld [vmem:[%s794 + $0x30] sm:$0xff]
        %v802 = vld [vmem:[%s794 + $0x38] sm:$0xff]
        %803 = vst [vmem:[#allocation3 + $0x28] sm:$0xff] %v795
        %804 = vst [vmem:[#allocation3 + $0x70] sm:$0xff] %v796
        %805 = vst [vmem:[#allocation3 + $0xb8] sm:$0xff] %v797
        %806 = vst [vmem:[#allocation3 + $0x100] sm:$0xff] %v798
        %807 = vst [vmem:[#allocation3 + $0x148] sm:$0xff] %v799
        %808 = vst [vmem:[#allocation3 + $0x190] sm:$0xff] %v800
        %809 = vst [vmem:[#allocation3 + $0x1d8] sm:$0xff] %v801
        %810 = vst [vmem:[#allocation3 + $0x220] sm:$0xff] %v802
        %s811 = scalar_lea.vmem [#allocation2], 32
        %v812 = vld [vmem:[%s811] sm:$0xff]
        %v813 = vld [vmem:[%s811 + $0x8] sm:$0xff]
        %v814 = vld [vmem:[%s811 + $0x10] sm:$0xff]
        %v815 = vld [vmem:[%s811 + $0x18] sm:$0xff]
        %v816 = vld [vmem:[%s811 + $0x20] sm:$0xff]
        %v817 = vld [vmem:[%s811 + $0x28] sm:$0xff]
        %v818 = vld [vmem:[%s811 + $0x30] sm:$0xff]
        %v819 = vld [vmem:[%s811 + $0x38] sm:$0xff]
        %820 = vst [vmem:[#allocation3 + $0x30] sm:$0xff] %v812
        %821 = vst [vmem:[#allocation3 + $0x78] sm:$0xff] %v813
        %822 = vst [vmem:[#allocation3 + $0xc0] sm:$0xff] %v814
        %823 = vst [vmem:[#allocation3 + $0x108] sm:$0xff] %v815
        %824 = vst [vmem:[#allocation3 + $0x150] sm:$0xff] %v816
        %825 = vst [vmem:[#allocation3 + $0x198] sm:$0xff] %v817
        %826 = vst [vmem:[#allocation3 + $0x1e0] sm:$0xff] %v818
        %827 = vst [vmem:[#allocation3 + $0x228] sm:$0xff] %v819
        %s828 = scalar_lea.vmem [#allocation2], 128
        %v829 = vld [vmem:[%s828] sm:$0xff]
        %v830 = vld [vmem:[%s828 + $0x8] sm:$0xff]
        %v831 = vld [vmem:[%s828 + $0x10] sm:$0xff]
        %v832 = vld [vmem:[%s828 + $0x18] sm:$0xff]
        %v833 = vld [vmem:[%s828 + $0x20] sm:$0xff]
        %v834 = vld [vmem:[%s828 + $0x28] sm:$0xff]
        %v835 = vld [vmem:[%s828 + $0x30] sm:$0xff]
        %v836 = vld [vmem:[%s828 + $0x38] sm:$0xff]
        %837 = vst [vmem:[#allocation3 + $0x38] sm:$0xff] %v829
        %838 = vst [vmem:[#allocation3 + $0x80] sm:$0xff] %v830
        %839 = vst [vmem:[#allocation3 + $0xc8] sm:$0xff] %v831
        %840 = vst [vmem:[#allocation3 + $0x110] sm:$0xff] %v832
        %841 = vst [vmem:[#allocation3 + $0x158] sm:$0xff] %v833
        %842 = vst [vmem:[#allocation3 + $0x1a0] sm:$0xff] %v834
        %843 = vst [vmem:[#allocation3 + $0x1e8] sm:$0xff] %v835
        %844 = vst [vmem:[#allocation3 + $0x230] sm:$0xff] %v836
        %s845 = scalar_lea.vmem [#allocation2], 224
        %v846 = vld [vmem:[%s845] sm:$0xff]
        %v847 = vld [vmem:[%s845 + $0x8] sm:$0xff]
        %v848 = vld [vmem:[%s845 + $0x10] sm:$0xff]
        %v849 = vld [vmem:[%s845 + $0x18] sm:$0xff]
        %v850 = vld [vmem:[%s845 + $0x20] sm:$0xff]
        %v851 = vld [vmem:[%s845 + $0x28] sm:$0xff]
        %v852 = vld [vmem:[%s845 + $0x30] sm:$0xff]
        %v853 = vld [vmem:[%s845 + $0x38] sm:$0xff]
        %854 = vst [vmem:[#allocation3 + $0x40] sm:$0xff] %v846
        %855 = vst [vmem:[#allocation3 + $0x88] sm:$0xff] %v847
        %856 = vst [vmem:[#allocation3 + $0xd0] sm:$0xff] %v848
        %857 = vst [vmem:[#allocation3 + $0x118] sm:$0xff] %v849
        %858 = vst [vmem:[#allocation3 + $0x160] sm:$0xff] %v850
        %859 = vst [vmem:[#allocation3 + $0x1a8] sm:$0xff] %v851
        %860 = vst [vmem:[#allocation3 + $0x1f0] sm:$0xff] %v852
        %861 = vst [vmem:[#allocation3 + $0x238] sm:$0xff] %v853
        %v862 = vld [vmem:[#allocation3] sm:$0xff]
        %v863 = vld [vmem:[#allocation3 + $0x8] sm:$0xff]
        %v864 = vld [vmem:[#allocation3 + $0x10] sm:$0xff]
        %v865 = vld [vmem:[#allocation3 + $0x18] sm:$0xff]
        %v866 = vld [vmem:[#allocation3 + $0x20] sm:$0xff]
        %v867 = vld [vmem:[#allocation3 + $0x28] sm:$0xff]
        %v868 = vld [vmem:[#allocation3 + $0x30] sm:$0xff]
        %v869 = vld [vmem:[#allocation3 + $0x38] sm:$0xff]
        %v870 = vld [vmem:[#allocation3 + $0x40] sm:$0xff]
        %v871 = vld [vmem:[#allocation3 + $0x48] sm:$0xff]
        %v872 = vld [vmem:[#allocation3 + $0x50] sm:$0xff]
        %v873 = vld [vmem:[#allocation3 + $0x58] sm:$0xff]
        %v874 = vld [vmem:[#allocation3 + $0x60] sm:$0xff]
        %v875 = vld [vmem:[#allocation3 + $0x68] sm:$0xff]
        %v876 = vld [vmem:[#allocation3 + $0x70] sm:$0xff]
        %v877 = vld [vmem:[#allocation3 + $0x78] sm:$0xff]
        %v878 = vld [vmem:[#allocation3 + $0x80] sm:$0xff]
        %v879 = vld [vmem:[#allocation3 + $0x88] sm:$0xff]
        %v880 = vld [vmem:[#allocation3 + $0x90] sm:$0xff]
        %v881 = vld [vmem:[#allocation3 + $0x98] sm:$0xff]
        %v882 = vld [vmem:[#allocation3 + $0xa0] sm:$0xff]
        %v883 = vld [vmem:[#allocation3 + $0xa8] sm:$0xff]
        %v884 = vld [vmem:[#allocation3 + $0xb0] sm:$0xff]
        %v885 = vld [vmem:[#allocation3 + $0xb8] sm:$0xff]
        %v886 = vld [vmem:[#allocation3 + $0xc0] sm:$0xff]
        %v887 = vld [vmem:[#allocation3 + $0xc8] sm:$0xff]
        %v888 = vld [vmem:[#allocation3 + $0xd0] sm:$0xff]
        %v889 = vld [vmem:[#allocation3 + $0xd8] sm:$0xff]
        %v890 = vld [vmem:[#allocation3 + $0xe0] sm:$0xff]
        %v891 = vld [vmem:[#allocation3 + $0xe8] sm:$0xff]
        %v892 = vld [vmem:[#allocation3 + $0xf0] sm:$0xff]
        %v893 = vld [vmem:[#allocation3 + $0xf8] sm:$0xff]
        %v894 = vld [vmem:[#allocation3 + $0x100] sm:$0xff]
        %v895 = vld [vmem:[#allocation3 + $0x108] sm:$0xff]
        %v896 = vld [vmem:[#allocation3 + $0x110] sm:$0xff]
        %v897 = vld [vmem:[#allocation3 + $0x118] sm:$0xff]
        %v898 = vld [vmem:[#allocation3 + $0x120] sm:$0xff]
        %v899 = vld [vmem:[#allocation3 + $0x128] sm:$0xff]
        %v900 = vld [vmem:[#allocation3 + $0x130] sm:$0xff]
        %v901 = vld [vmem:[#allocation3 + $0x138] sm:$0xff]
        %v902 = vld [vmem:[#allocation3 + $0x140] sm:$0xff]
        %v903 = vld [vmem:[#allocation3 + $0x148] sm:$0xff]
        %v904 = vld [vmem:[#allocation3 + $0x150] sm:$0xff]
        %v905 = vld [vmem:[#allocation3 + $0x158] sm:$0xff]
        %v906 = vld [vmem:[#allocation3 + $0x160] sm:$0xff]
        %v907 = vld [vmem:[#allocation3 + $0x168] sm:$0xff]
        %v908 = vld [vmem:[#allocation3 + $0x170] sm:$0xff]
        %v909 = vld [vmem:[#allocation3 + $0x178] sm:$0xff]
        %v910 = vld [vmem:[#allocation3 + $0x180] sm:$0xff]
        %v911 = vld [vmem:[#allocation3 + $0x188] sm:$0xff]
        %v912 = vld [vmem:[#allocation3 + $0x190] sm:$0xff]
        %v913 = vld [vmem:[#allocation3 + $0x198] sm:$0xff]
        %v914 = vld [vmem:[#allocation3 + $0x1a0] sm:$0xff]
        %v915 = vld [vmem:[#allocation3 + $0x1a8] sm:$0xff]
        %v916 = vld [vmem:[#allocation3 + $0x1b0] sm:$0xff]
        %v917 = vld [vmem:[#allocation3 + $0x1b8] sm:$0xff]
        %v918 = vld [vmem:[#allocation3 + $0x1c0] sm:$0xff]
        %v919 = vld [vmem:[#allocation3 + $0x1c8] sm:$0xff]
        %v920 = vld [vmem:[#allocation3 + $0x1d0] sm:$0xff]
        %v921 = vld [vmem:[#allocation3 + $0x1d8] sm:$0xff]
        %v922 = vld [vmem:[#allocation3 + $0x1e0] sm:$0xff]
        %v923 = vld [vmem:[#allocation3 + $0x1e8] sm:$0xff]
        %v924 = vld [vmem:[#allocation3 + $0x1f0] sm:$0xff]
        %v925 = vld [vmem:[#allocation3 + $0x1f8] sm:$0xff]
        %v926 = vld [vmem:[#allocation3 + $0x200] sm:$0xff]
        %v927 = vld [vmem:[#allocation3 + $0x208] sm:$0xff]
        %v928 = vld [vmem:[#allocation3 + $0x210] sm:$0xff]
        %v929 = vld [vmem:[#allocation3 + $0x218] sm:$0xff]
        %v930 = vld [vmem:[#allocation3 + $0x220] sm:$0xff]
        %v931 = vld [vmem:[#allocation3 + $0x228] sm:$0xff]
        %v932 = vld [vmem:[#allocation3 + $0x230] sm:$0xff]
        %v933 = vld [vmem:[#allocation3 + $0x238] sm:$0xff]
        %v934 = vld [vmem:[%s1] sm:$0xf]
        %v935 = vld [vmem:[%s1 + $0x4] sm:$0xf]
        %v936 = vld [vmem:[%s1 + $0x8] sm:$0xf]
        %v937 = vld [vmem:[%s1 + $0xc] sm:$0xf]
        %v938 = vld [vmem:[%s1 + $0x10] sm:$0xf]
        %v939 = vld [vmem:[%s1 + $0x14] sm:$0xf]
        %v940 = vld [vmem:[%s1 + $0x18] sm:$0xf]
        %v941 = vld [vmem:[%s1 + $0x1c] sm:$0xf]
        %v942 = vld [vmem:[%s1 + $0x20] sm:$0xf]
        %v943 = vld [vmem:[%s1 + $0x24] sm:$0xf]
        %v944 = vld [vmem:[%s1 + $0x28] sm:$0xf]
        %v945 = vld [vmem:[%s1 + $0x2c] sm:$0xf]
        %v946 = vld [vmem:[%s1 + $0x30] sm:$0xf]
        %v947 = vld [vmem:[%s1 + $0x34] sm:$0xf]
        %v948 = vld [vmem:[%s1 + $0x38] sm:$0xf]
        %v949 = vld [vmem:[%s1 + $0x3c] sm:$0xf]
        %v950 = vld [vmem:[%s1 + $0x40] sm:$0xf]
        %v951 = vld [vmem:[%s1 + $0x44] sm:$0xf]
        %v952 = vld [vmem:[%s1 + $0x48] sm:$0xf]
        %v953 = vld [vmem:[%s1 + $0x4c] sm:$0xf]
        %v954 = vld [vmem:[%s1 + $0x50] sm:$0xf]
        %v955 = vld [vmem:[%s1 + $0x54] sm:$0xf]
        %v956 = vld [vmem:[%s1 + $0x58] sm:$0xf]
        %v957 = vld [vmem:[%s1 + $0x5c] sm:$0xf]
        %v958 = vld [vmem:[%s1 + $0x60] sm:$0xf]
        %v959 = vld [vmem:[%s1 + $0x64] sm:$0xf]
        %v960 = vld [vmem:[%s1 + $0x68] sm:$0xf]
        %v961 = vld [vmem:[%s1 + $0x6c] sm:$0xf]
        %v962 = vld [vmem:[%s1 + $0x70] sm:$0xf]
        %v963 = vld [vmem:[%s1 + $0x74] sm:$0xf]
        %v964 = vld [vmem:[%s1 + $0x78] sm:$0xf]
        %v965 = vld [vmem:[%s1 + $0x7c] sm:$0xf]
        %v966 = vld [vmem:[%s1 + $0x80] sm:$0xf]
        %v967 = vld [vmem:[%s1 + $0x84] sm:$0xf]
        %v968 = vld [vmem:[%s1 + $0x88] sm:$0xf]
        %v969 = vld [vmem:[%s1 + $0x8c] sm:$0xf]
        %v970 = vld [vmem:[%s1 + $0x90] sm:$0xf]
        %v971 = vld [vmem:[%s1 + $0x94] sm:$0xf]
        %v972 = vld [vmem:[%s1 + $0x98] sm:$0xf]
        %v973 = vld [vmem:[%s1 + $0x9c] sm:$0xf]
        %v974 = vld [vmem:[%s1 + $0xa0] sm:$0xf]
        %v975 = vld [vmem:[%s1 + $0xa4] sm:$0xf]
        %v976 = vld [vmem:[%s1 + $0xa8] sm:$0xf]
        %v977 = vld [vmem:[%s1 + $0xac] sm:$0xf]
        %v978 = vld [vmem:[%s1 + $0xb0] sm:$0xf]
        %v979 = vld [vmem:[%s1 + $0xb4] sm:$0xf]
        %v980 = vld [vmem:[%s1 + $0xb8] sm:$0xf]
        %v981 = vld [vmem:[%s1 + $0xbc] sm:$0xf]
        %v982 = vld [vmem:[%s1 + $0xc0] sm:$0xf]
        %v983 = vld [vmem:[%s1 + $0xc4] sm:$0xf]
        %v984 = vld [vmem:[%s1 + $0xc8] sm:$0xf]
        %v985 = vld [vmem:[%s1 + $0xcc] sm:$0xf]
        %v986 = vld [vmem:[%s1 + $0xd0] sm:$0xf]
        %v987 = vld [vmem:[%s1 + $0xd4] sm:$0xf]
        %v988 = vld [vmem:[%s1 + $0xd8] sm:$0xf]
        %v989 = vld [vmem:[%s1 + $0xdc] sm:$0xf]
        %v990 = vld [vmem:[%s1 + $0xe0] sm:$0xf]
        %v991 = vld [vmem:[%s1 + $0xe4] sm:$0xf]
        %v992 = vld [vmem:[%s1 + $0xe8] sm:$0xf]
        %v993 = vld [vmem:[%s1 + $0xec] sm:$0xf]
        %v994 = vld [vmem:[%s1 + $0xf0] sm:$0xf]
        %v995 = vld [vmem:[%s1 + $0xf4] sm:$0xf]
        %v996 = vld [vmem:[%s1 + $0xf8] sm:$0xf]
        %v997 = vld [vmem:[%s1 + $0xfc] sm:$0xf]
        %v998 = vld [vmem:[%s1 + $0x100] sm:$0xf]
        %v999 = vld [vmem:[%s1 + $0x104] sm:$0xf]
        %v1000 = vld [vmem:[%s1 + $0x108] sm:$0xf]
        %v1001 = vld [vmem:[%s1 + $0x10c] sm:$0xf]
        %v1002 = vld [vmem:[%s1 + $0x110] sm:$0xf]
        %v1003 = vld [vmem:[%s1 + $0x114] sm:$0xf]
        %v1004 = vld [vmem:[%s1 + $0x118] sm:$0xf]
        %v1005 = vld [vmem:[%s1 + $0x11c] sm:$0xf]
        %v1006 = vld [vmem:[%s1 + $0x120] sm:$0xf]
        %v1007 = vld [vmem:[%s1 + $0x124] sm:$0xf]
        %v1008 = vld [vmem:[%s1 + $0x128] sm:$0xf]
        %v1009 = vld [vmem:[%s1 + $0x12c] sm:$0xf]
        %v1010 = vld [vmem:[%s1 + $0x130] sm:$0xf]
        %v1011 = vld [vmem:[%s1 + $0x134] sm:$0xf]
        %v1012 = vld [vmem:[%s1 + $0x138] sm:$0xf]
        %v1013 = vld [vmem:[%s1 + $0x13c] sm:$0xf]
        %v1014 = vld [vmem:[%s1 + $0x140] sm:$0xf]
        %v1015 = vld [vmem:[%s1 + $0x144] sm:$0xf]
        %v1016 = vld [vmem:[%s1 + $0x148] sm:$0xf]
        %v1017 = vld [vmem:[%s1 + $0x14c] sm:$0xf]
        %v1018 = vld [vmem:[%s1 + $0x150] sm:$0xf]
        %v1019 = vld [vmem:[%s1 + $0x154] sm:$0xf]
        %v1020 = vld [vmem:[%s1 + $0x158] sm:$0xf]
        %v1021 = vld [vmem:[%s1 + $0x15c] sm:$0xf]
        %v1022 = vld [vmem:[%s1 + $0x160] sm:$0xf]
        %v1023 = vld [vmem:[%s1 + $0x164] sm:$0xf]
        %v1024 = vld [vmem:[%s1 + $0x168] sm:$0xf]
        %v1025 = vld [vmem:[%s1 + $0x16c] sm:$0xf]
        %v1026 = vld [vmem:[%s1 + $0x170] sm:$0xf]
        %v1027 = vld [vmem:[%s1 + $0x174] sm:$0xf]
        %v1028 = vld [vmem:[%s1 + $0x178] sm:$0xf]
        %v1029 = vld [vmem:[%s1 + $0x17c] sm:$0xf]
        %v1030 = vld [vmem:[%s1 + $0x180] sm:$0xf]
        %v1031 = vld [vmem:[%s1 + $0x184] sm:$0xf]
        %v1032 = vld [vmem:[%s1 + $0x188] sm:$0xf]
        %v1033 = vld [vmem:[%s1 + $0x18c] sm:$0xf]
        %v1034 = vld [vmem:[%s1 + $0x190] sm:$0xf]
        %v1035 = vld [vmem:[%s1 + $0x194] sm:$0xf]
        %v1036 = vld [vmem:[%s1 + $0x198] sm:$0xf]
        %v1037 = vld [vmem:[%s1 + $0x19c] sm:$0xf]
        %v1038 = vld [vmem:[%s1 + $0x1a0] sm:$0xf]
        %v1039 = vld [vmem:[%s1 + $0x1a4] sm:$0xf]
        %v1040 = vld [vmem:[%s1 + $0x1a8] sm:$0xf]
        %v1041 = vld [vmem:[%s1 + $0x1ac] sm:$0xf]
        %v1042 = vld [vmem:[%s1 + $0x1b0] sm:$0xf]
        %v1043 = vld [vmem:[%s1 + $0x1b4] sm:$0xf]
        %v1044 = vld [vmem:[%s1 + $0x1b8] sm:$0xf]
        %v1045 = vld [vmem:[%s1 + $0x1bc] sm:$0xf]
        %v1046 = vld [vmem:[%s1 + $0x1c0] sm:$0xf]
        %v1047 = vld [vmem:[%s1 + $0x1c4] sm:$0xf]
        %v1048 = vld [vmem:[%s1 + $0x1c8] sm:$0xf]
        %v1049 = vld [vmem:[%s1 + $0x1cc] sm:$0xf]
        %v1050 = vld [vmem:[%s1 + $0x1d0] sm:$0xf]
        %v1051 = vld [vmem:[%s1 + $0x1d4] sm:$0xf]
        %v1052 = vld [vmem:[%s1 + $0x1d8] sm:$0xf]
        %v1053 = vld [vmem:[%s1 + $0x1dc] sm:$0xf]
        %v1054 = vld [vmem:[%s1 + $0x1e0] sm:$0xf]
        %v1055 = vld [vmem:[%s1 + $0x1e4] sm:$0xf]
        %v1056 = vld [vmem:[%s1 + $0x1e8] sm:$0xf]
        %v1057 = vld [vmem:[%s1 + $0x1ec] sm:$0xf]
        %v1058 = vld [vmem:[%s1 + $0x1f0] sm:$0xf]
        %v1059 = vld [vmem:[%s1 + $0x1f4] sm:$0xf]
        %v1060 = vld [vmem:[%s1 + $0x1f8] sm:$0xf]
        %v1061 = vld [vmem:[%s1 + $0x1fc] sm:$0xf]
        %v1062 = vld [vmem:[%s1 + $0x200] sm:$0xf]
        %v1063 = vld [vmem:[%s1 + $0x204] sm:$0xf]
        %v1064 = vld [vmem:[%s1 + $0x208] sm:$0xf]
        %v1065 = vld [vmem:[%s1 + $0x20c] sm:$0xf]
        %v1066 = vld [vmem:[%s1 + $0x210] sm:$0xf]
        %v1067 = vld [vmem:[%s1 + $0x214] sm:$0xf]
        %v1068 = vld [vmem:[%s1 + $0x218] sm:$0xf]
        %v1069 = vld [vmem:[%s1 + $0x21c] sm:$0xf]
        %v1070 = vld [vmem:[%s1 + $0x220] sm:$0xf]
        %v1071 = vld [vmem:[%s1 + $0x224] sm:$0xf]
        %v1072 = vld [vmem:[%s1 + $0x228] sm:$0xf]
        %v1073 = vld [vmem:[%s1 + $0x22c] sm:$0xf]
        %v1074 = vld [vmem:[%s1 + $0x230] sm:$0xf]
        %v1075 = vld [vmem:[%s1 + $0x234] sm:$0xf]
        %v1076 = vld [vmem:[%s1 + $0x238] sm:$0xf]
        %v1077 = vld [vmem:[%s1 + $0x23c] sm:$0xf]
        %v1222 = vunpack.c.l.b16 %v934
        %v1223 = vunpack.c.l.b16 %v935
        %v1224 = vunpack.c.l.b16 %v936
        %v1225 = vunpack.c.l.b16 %v937
        %v1226 = vunpack.c.l.b16 %v938
        %v1227 = vunpack.c.l.b16 %v939
        %v1228 = vunpack.c.l.b16 %v940
        %v1229 = vunpack.c.l.b16 %v941
        %v1230 = vunpack.c.l.b16 %v942
        %v1231 = vunpack.c.l.b16 %v943
        %v1232 = vunpack.c.l.b16 %v944
        %v1233 = vunpack.c.l.b16 %v945
        %v1234 = vunpack.c.l.b16 %v946
        %v1235 = vunpack.c.l.b16 %v947
        %v1236 = vunpack.c.l.b16 %v948
        %v1237 = vunpack.c.l.b16 %v949
        %v1238 = vunpack.c.l.b16 %v950
        %v1239 = vunpack.c.l.b16 %v951
        %v1240 = vunpack.c.l.b16 %v952
        %v1241 = vunpack.c.l.b16 %v953
        %v1242 = vunpack.c.l.b16 %v954
        %v1243 = vunpack.c.l.b16 %v955
        %v1244 = vunpack.c.l.b16 %v956
        %v1245 = vunpack.c.l.b16 %v957
        %v1246 = vunpack.c.l.b16 %v958
        %v1247 = vunpack.c.l.b16 %v959
        %v1248 = vunpack.c.l.b16 %v960
        %v1249 = vunpack.c.l.b16 %v961
        %v1250 = vunpack.c.l.b16 %v962
        %v1251 = vunpack.c.l.b16 %v963
        %v1252 = vunpack.c.l.b16 %v964
        %v1253 = vunpack.c.l.b16 %v965
        %v1254 = vunpack.c.l.b16 %v966
        %v1255 = vunpack.c.l.b16 %v967
        %v1256 = vunpack.c.l.b16 %v968
        %v1257 = vunpack.c.l.b16 %v969
        %v1258 = vunpack.c.l.b16 %v970
        %v1259 = vunpack.c.l.b16 %v971
        %v1260 = vunpack.c.l.b16 %v972
        %v1261 = vunpack.c.l.b16 %v973
        %v1262 = vunpack.c.l.b16 %v974
        %v1263 = vunpack.c.l.b16 %v975
        %v1264 = vunpack.c.l.b16 %v976
        %v1265 = vunpack.c.l.b16 %v977
        %v1266 = vunpack.c.l.b16 %v978
        %v1267 = vunpack.c.l.b16 %v979
        %v1268 = vunpack.c.l.b16 %v980
        %v1269 = vunpack.c.l.b16 %v981
        %v1270 = vunpack.c.l.b16 %v982
        %v1271 = vunpack.c.l.b16 %v983
        %v1272 = vunpack.c.l.b16 %v984
        %v1273 = vunpack.c.l.b16 %v985
        %v1274 = vunpack.c.l.b16 %v986
        %v1275 = vunpack.c.l.b16 %v987
        %v1276 = vunpack.c.l.b16 %v988
        %v1277 = vunpack.c.l.b16 %v989
        %v1278 = vunpack.c.l.b16 %v990
        %v1279 = vunpack.c.l.b16 %v991
        %v1280 = vunpack.c.l.b16 %v992
        %v1281 = vunpack.c.l.b16 %v993
        %v1282 = vunpack.c.l.b16 %v994
        %v1283 = vunpack.c.l.b16 %v995
        %v1284 = vunpack.c.l.b16 %v996
        %v1285 = vunpack.c.l.b16 %v997
        %v1286 = vunpack.c.l.b16 %v998
        %v1287 = vunpack.c.l.b16 %v999
        %v1288 = vunpack.c.l.b16 %v1000
        %v1289 = vunpack.c.l.b16 %v1001
        %v1290 = vunpack.c.l.b16 %v1002
        %v1291 = vunpack.c.l.b16 %v1003
        %v1292 = vunpack.c.l.b16 %v1004
        %v1293 = vunpack.c.l.b16 %v1005
        %v1294 = vunpack.c.l.b16 %v1006
        %v1295 = vunpack.c.l.b16 %v1007
        %v1296 = vunpack.c.l.b16 %v1008
        %v1297 = vunpack.c.l.b16 %v1009
        %v1298 = vunpack.c.l.b16 %v1010
        %v1299 = vunpack.c.l.b16 %v1011
        %v1300 = vunpack.c.l.b16 %v1012
        %v1301 = vunpack.c.l.b16 %v1013
        %v1302 = vunpack.c.l.b16 %v1014
        %v1303 = vunpack.c.l.b16 %v1015
        %v1304 = vunpack.c.l.b16 %v1016
        %v1305 = vunpack.c.l.b16 %v1017
        %v1306 = vunpack.c.l.b16 %v1018
        %v1307 = vunpack.c.l.b16 %v1019
        %v1308 = vunpack.c.l.b16 %v1020
        %v1309 = vunpack.c.l.b16 %v1021
        %v1310 = vunpack.c.l.b16 %v1022
        %v1311 = vunpack.c.l.b16 %v1023
        %v1312 = vunpack.c.l.b16 %v1024
        %v1313 = vunpack.c.l.b16 %v1025
        %v1314 = vunpack.c.l.b16 %v1026
        %v1315 = vunpack.c.l.b16 %v1027
        %v1316 = vunpack.c.l.b16 %v1028
        %v1317 = vunpack.c.l.b16 %v1029
        %v1318 = vunpack.c.l.b16 %v1030
        %v1319 = vunpack.c.l.b16 %v1031
        %v1320 = vunpack.c.l.b16 %v1032
        %v1321 = vunpack.c.l.b16 %v1033
        %v1322 = vunpack.c.l.b16 %v1034
        %v1323 = vunpack.c.l.b16 %v1035
        %v1324 = vunpack.c.l.b16 %v1036
        %v1325 = vunpack.c.l.b16 %v1037
        %v1326 = vunpack.c.l.b16 %v1038
        %v1327 = vunpack.c.l.b16 %v1039
        %v1328 = vunpack.c.l.b16 %v1040
        %v1329 = vunpack.c.l.b16 %v1041
        %v1330 = vunpack.c.l.b16 %v1042
        %v1331 = vunpack.c.l.b16 %v1043
        %v1332 = vunpack.c.l.b16 %v1044
        %v1333 = vunpack.c.l.b16 %v1045
        %v1334 = vunpack.c.l.b16 %v1046
        %v1335 = vunpack.c.l.b16 %v1047
        %v1336 = vunpack.c.l.b16 %v1048
        %v1337 = vunpack.c.l.b16 %v1049
        %v1338 = vunpack.c.l.b16 %v1050
        %v1339 = vunpack.c.l.b16 %v1051
        %v1340 = vunpack.c.l.b16 %v1052
        %v1341 = vunpack.c.l.b16 %v1053
        %v1342 = vunpack.c.l.b16 %v1054
        %v1343 = vunpack.c.l.b16 %v1055
        %v1344 = vunpack.c.l.b16 %v1056
        %v1345 = vunpack.c.l.b16 %v1057
        %v1346 = vunpack.c.l.b16 %v1058
        %v1347 = vunpack.c.l.b16 %v1059
        %v1348 = vunpack.c.l.b16 %v1060
        %v1349 = vunpack.c.l.b16 %v1061
        %v1350 = vunpack.c.l.b16 %v1062
        %v1351 = vunpack.c.l.b16 %v1063
        %v1352 = vunpack.c.l.b16 %v1064
        %v1353 = vunpack.c.l.b16 %v1065
        %v1354 = vunpack.c.l.b16 %v1066
        %v1355 = vunpack.c.l.b16 %v1067
        %v1356 = vunpack.c.l.b16 %v1068
        %v1357 = vunpack.c.l.b16 %v1069
        %v1358 = vunpack.c.l.b16 %v1070
        %v1359 = vunpack.c.l.b16 %v1071
        %v1360 = vunpack.c.l.b16 %v1072
        %v1361 = vunpack.c.l.b16 %v1073
        %v1362 = vunpack.c.l.b16 %v1074
        %v1363 = vunpack.c.l.b16 %v1075
        %v1364 = vunpack.c.l.b16 %v1076
        %v1365 = vunpack.c.l.b16 %v1077
        %v1366 = vpack.c.b16 %v1223, %v1222
        %v1367 = vpack.c.b16 %v1225, %v1224
        %v1368 = vpack.c.b16 %v1227, %v1226
        %v1369 = vpack.c.b16 %v1229, %v1228
        %v1370 = vpack.c.b16 %v1231, %v1230
        %v1371 = vpack.c.b16 %v1233, %v1232
        %v1372 = vpack.c.b16 %v1235, %v1234
        %v1373 = vpack.c.b16 %v1237, %v1236
        %v1374 = vpack.c.b16 %v1239, %v1238
        %v1375 = vpack.c.b16 %v1241, %v1240
        %v1376 = vpack.c.b16 %v1243, %v1242
        %v1377 = vpack.c.b16 %v1245, %v1244
        %v1378 = vpack.c.b16 %v1247, %v1246
        %v1379 = vpack.c.b16 %v1249, %v1248
        %v1380 = vpack.c.b16 %v1251, %v1250
        %v1381 = vpack.c.b16 %v1253, %v1252
        %v1382 = vpack.c.b16 %v1255, %v1254
        %v1383 = vpack.c.b16 %v1257, %v1256
        %v1384 = vpack.c.b16 %v1259, %v1258
        %v1385 = vpack.c.b16 %v1261, %v1260
        %v1386 = vpack.c.b16 %v1263, %v1262
        %v1387 = vpack.c.b16 %v1265, %v1264
        %v1388 = vpack.c.b16 %v1267, %v1266
        %v1389 = vpack.c.b16 %v1269, %v1268
        %v1390 = vpack.c.b16 %v1271, %v1270
        %v1391 = vpack.c.b16 %v1273, %v1272
        %v1392 = vpack.c.b16 %v1275, %v1274
        %v1393 = vpack.c.b16 %v1277, %v1276
        %v1394 = vpack.c.b16 %v1279, %v1278
        %v1395 = vpack.c.b16 %v1281, %v1280
        %v1396 = vpack.c.b16 %v1283, %v1282
        %v1397 = vpack.c.b16 %v1285, %v1284
        %v1398 = vpack.c.b16 %v1287, %v1286
        %v1399 = vpack.c.b16 %v1289, %v1288
        %v1400 = vpack.c.b16 %v1291, %v1290
        %v1401 = vpack.c.b16 %v1293, %v1292
        %v1402 = vpack.c.b16 %v1295, %v1294
        %v1403 = vpack.c.b16 %v1297, %v1296
        %v1404 = vpack.c.b16 %v1299, %v1298
        %v1405 = vpack.c.b16 %v1301, %v1300
        %v1406 = vpack.c.b16 %v1303, %v1302
        %v1407 = vpack.c.b16 %v1305, %v1304
        %v1408 = vpack.c.b16 %v1307, %v1306
        %v1409 = vpack.c.b16 %v1309, %v1308
        %v1410 = vpack.c.b16 %v1311, %v1310
        %v1411 = vpack.c.b16 %v1313, %v1312
        %v1412 = vpack.c.b16 %v1315, %v1314
        %v1413 = vpack.c.b16 %v1317, %v1316
        %v1414 = vpack.c.b16 %v1319, %v1318
        %v1415 = vpack.c.b16 %v1321, %v1320
        %v1416 = vpack.c.b16 %v1323, %v1322
        %v1417 = vpack.c.b16 %v1325, %v1324
        %v1418 = vpack.c.b16 %v1327, %v1326
        %v1419 = vpack.c.b16 %v1329, %v1328
        %v1420 = vpack.c.b16 %v1331, %v1330
        %v1421 = vpack.c.b16 %v1333, %v1332
        %v1422 = vpack.c.b16 %v1335, %v1334
        %v1423 = vpack.c.b16 %v1337, %v1336
        %v1424 = vpack.c.b16 %v1339, %v1338
        %v1425 = vpack.c.b16 %v1341, %v1340
        %v1426 = vpack.c.b16 %v1343, %v1342
        %v1427 = vpack.c.b16 %v1345, %v1344
        %v1428 = vpack.c.b16 %v1347, %v1346
        %v1429 = vpack.c.b16 %v1349, %v1348
        %v1430 = vpack.c.b16 %v1351, %v1350
        %v1431 = vpack.c.b16 %v1353, %v1352
        %v1432 = vpack.c.b16 %v1355, %v1354
        %v1433 = vpack.c.b16 %v1357, %v1356
        %v1434 = vpack.c.b16 %v1359, %v1358
        %v1435 = vpack.c.b16 %v1361, %v1360
        %v1436 = vpack.c.b16 %v1363, %v1362
        %v1437 = vpack.c.b16 %v1365, %v1364
        %1510 = vmatprep.subr.bf16.mxu0 0
        %1511 = vmatpush1.bf16.msra.mxu0 %v1366
        %1512 = vmatprep.subr.bf16.mxu0 0
        %1513 = vmatpush1.bf16.msra.mxu0 %v1367
        %1514 = vmatprep.subr.bf16.mxu0 0
        %1515 = vmatpush1.bf16.msra.mxu0 %v1368
        %1516 = vmatprep.subr.bf16.mxu0 0
        %1517 = vmatpush1.bf16.msra.mxu0 %v1369
        %1518 = vmatprep.subr.bf16.mxu0 0
        %1519 = vmatpush1.bf16.msra.mxu0 %v1370
        %1520 = vmatprep.subr.bf16.mxu0 0
        %1521 = vmatpush1.bf16.msra.mxu0 %v1371
        %1522 = vmatprep.subr.bf16.mxu0 0
        %1523 = vmatpush1.bf16.msra.mxu0 %v1372
        %1524 = vmatprep.subr.bf16.mxu0 0
        %1525 = vmatpush1.bf16.msra.mxu0 %v1373
        %1526 = vmatprep.subr.bf16.mxu0 0
        %1527 = vmatpush1.bf16.msra.mxu0 %v1374
        %1528 = vmatprep.subr.bf16.mxu0 0
        %1529 = vmatpush1.bf16.msra.mxu0 %v1375
        %1530 = vmatprep.subr.bf16.mxu0 0
        %1531 = vmatpush1.bf16.msra.mxu0 %v1376
        %1532 = vmatprep.subr.bf16.mxu0 0
        %1533 = vmatpush1.bf16.msra.mxu0 %v1377
        %1534 = vmatprep.subr.bf16.mxu0 0
        %1535 = vmatpush1.bf16.msra.mxu0 %v1378
        %1536 = vmatprep.subr.bf16.mxu0 0
        %1537 = vmatpush1.bf16.msra.mxu0 %v1379
        %1538 = vmatprep.subr.bf16.mxu0 0
        %1539 = vmatpush1.bf16.msra.mxu0 %v1380
        %1540 = vmatprep.subr.bf16.mxu0 0
        %1541 = vmatpush1.bf16.msra.mxu0 %v1381
        %1542 = vmatprep.mubr.bf16.mxu0 %v863
        %1543 = vmatmul.mubr.bf16.gmra.mrb[0].mxu0 %v862
        %v1544 = vpop.f32.mrb[0].mxu0
        %v1545 = vadd.f32 0.0, %v1544
        %v1546 = vpop.f32.mrb[0].mxu0
        %v1547 = vpop.f32.mrb[0].mxu0
        %v1548 = vadd.f32 0.0, %v1547
        %v1549 = vpop.f32.mrb[0].mxu0
        %1550 = vmatprep.mubr.bf16.mxu0 %v872
        %1551 = vmatmul.mubr.bf16.gmra.mrb[0].mxu0 %v871
        %v1552 = vpop.f32.mrb[0].mxu0
        %v1553 = vadd.f32 0.0, %v1552
        %v1554 = vpop.f32.mrb[0].mxu0
        %v1555 = vpop.f32.mrb[0].mxu0
        %v1556 = vadd.f32 0.0, %v1555
        %v1557 = vpop.f32.mrb[0].mxu0
        %1558 = vmatprep.mubr.bf16.mxu0 %v881
        %1559 = vmatmul.mubr.bf16.gmra.mrb[0].mxu0 %v880
        %v1560 = vpop.f32.mrb[0].mxu0
        %v1561 = vadd.f32 0.0, %v1560
        %v1562 = vpop.f32.mrb[0].mxu0
        %v1563 = vpop.f32.mrb[0].mxu0
        %v1564 = vadd.f32 0.0, %v1563
        %v1565 = vpop.f32.mrb[0].mxu0
        %1566 = vmatprep.mubr.bf16.mxu0 %v890
        %1567 = vmatmul.mubr.bf16.gmra.mrb[0].mxu0 %v889
        %v1568 = vpop.f32.mrb[0].mxu0
        %v1569 = vadd.f32 0.0, %v1568
        %v1570 = vpop.f32.mrb[0].mxu0
        %v1571 = vpop.f32.mrb[0].mxu0
        %v1572 = vadd.f32 0.0, %v1571
        %v1573 = vpop.f32.mrb[0].mxu0
        %1574 = vmatprep.mubr.bf16.mxu0 %v899
        %1575 = vmatmul.mubr.bf16.gmra.mrb[0].mxu0 %v898
        %v1576 = vpop.f32.mrb[0].mxu0
        %v1577 = vadd.f32 0.0, %v1576
        %v1578 = vpop.f32.mrb[0].mxu0
        %v1579 = vpop.f32.mrb[0].mxu0
        %v1580 = vadd.f32 0.0, %v1579
        %v1581 = vpop.f32.mrb[0].mxu0
        %1582 = vmatprep.mubr.bf16.mxu0 %v908
        %1583 = vmatmul.mubr.bf16.gmra.mrb[0].mxu0 %v907
        %v1584 = vpop.f32.mrb[0].mxu0
        %v1585 = vadd.f32 0.0, %v1584
        %v1586 = vpop.f32.mrb[0].mxu0
        %v1587 = vpop.f32.mrb[0].mxu0
        %v1588 = vadd.f32 0.0, %v1587
        %v1589 = vpop.f32.mrb[0].mxu0
        %1590 = vmatprep.mubr.bf16.mxu0 %v917
        %1591 = vmatmul.mubr.bf16.gmra.mrb[0].mxu0 %v916
        %v1592 = vpop.f32.mrb[0].mxu0
        %v1593 = vadd.f32 0.0, %v1592
        %v1594 = vpop.f32.mrb[0].mxu0
        %v1595 = vpop.f32.mrb[0].mxu0
        %v1596 = vadd.f32 0.0, %v1595
        %v1597 = vpop.f32.mrb[0].mxu0
        %1598 = vmatprep.mubr.bf16.mxu0 %v926
        %1599 = vmatmul.mubr.bf16.gmra.mrb[0].mxu0 %v925
        %v1600 = vpop.f32.mrb[0].mxu0
        %v1601 = vadd.f32 0.0, %v1600
        %v1602 = vpop.f32.mrb[0].mxu0
        %v1603 = vpop.f32.mrb[0].mxu0
        %v1604 = vadd.f32 0.0, %v1603
        %v1605 = vpop.f32.mrb[0].mxu0
        %1606 = vdwg.mxu0
        %1607 = vmatprep.subr.bf16.mxu0 0
        %1608 = vmatpush1.bf16.msra.mxu0 %v1382
        %1609 = vmatprep.subr.bf16.mxu0 0
        %1610 = vmatpush1.bf16.msra.mxu0 %v1383
        %1611 = vmatprep.subr.bf16.mxu0 0
        %1612 = vmatpush1.bf16.msra.mxu0 %v1384
        %1613 = vmatprep.subr.bf16.mxu0 0
        %1614 = vmatpush1.bf16.msra.mxu0 %v1385
        %1615 = vmatprep.subr.bf16.mxu0 0
        %1616 = vmatpush1.bf16.msra.mxu0 %v1386
        %1617 = vmatprep.subr.bf16.mxu0 0
        %1618 = vmatpush1.bf16.msra.mxu0 %v1387
        %1619 = vmatprep.subr.bf16.mxu0 0
        %1620 = vmatpush1.bf16.msra.mxu0 %v1388
        %1621 = vmatprep.subr.bf16.mxu0 0
        %1622 = vmatpush1.bf16.msra.mxu0 %v1389
        %1623 = vmatprep.subr.bf16.mxu0 0
        %1624 = vmatpush1.bf16.msra.mxu0 %v1390
        %1625 = vmatprep.subr.bf16.mxu0 0
        %1626 = vmatpush1.bf16.msra.mxu0 %v1391
        %1627 = vmatprep.subr.bf16.mxu0 0
        %1628 = vmatpush1.bf16.msra.mxu0 %v1392
        %1629 = vmatprep.subr.bf16.mxu0 0
        %1630 = vmatpush1.bf16.msra.mxu0 %v1393
        %1631 = vmatprep.subr.bf16.mxu0 0
        %1632 = vmatpush1.bf16.msra.mxu0 %v1394
        %1633 = vmatprep.subr.bf16.mxu0 0
        %1634 = vmatpush1.bf16.msra.mxu0 %v1395
        %1635 = vmatprep.subr.bf16.mxu0 0
        %1636 = vmatpush1.bf16.msra.mxu0 %v1396
        %1637 = vmatprep.subr.bf16.mxu0 0
        %1638 = vmatpush1.bf16.msra.mxu0 %v1397
        %1639 = vmatprep.mubr.bf16.mxu0 %v865
        %1640 = vmatmul.mubr.bf16.gmra.mrb[0].mxu0 %v864
        %v1641 = vpop.f32.mrb[0].mxu0
        %v1642 = vadd.f32 %v1545, %v1641
        %v1643 = vpop.f32.mrb[0].mxu0
        %v1644 = vpop.f32.mrb[0].mxu0
        %v1645 = vadd.f32 %v1548, %v1644
        %v1646 = vpop.f32.mrb[0].mxu0
        %1647 = vmatprep.mubr.bf16.mxu0 %v874
        %1648 = vmatmul.mubr.bf16.gmra.mrb[0].mxu0 %v873
        %v1649 = vpop.f32.mrb[0].mxu0
        %v1650 = vadd.f32 %v1553, %v1649
        %v1651 = vpop.f32.mrb[0].mxu0
        %v1652 = vpop.f32.mrb[0].mxu0
        %v1653 = vadd.f32 %v1556, %v1652
        %v1654 = vpop.f32.mrb[0].mxu0
        %1655 = vmatprep.mubr.bf16.mxu0 %v883
        %1656 = vmatmul.mubr.bf16.gmra.mrb[0].mxu0 %v882
        %v1657 = vpop.f32.mrb[0].mxu0
        %v1658 = vadd.f32 %v1561, %v1657
        %v1659 = vpop.f32.mrb[0].mxu0
        %v1660 = vpop.f32.mrb[0].mxu0
        %v1661 = vadd.f32 %v1564, %v1660
        %v1662 = vpop.f32.mrb[0].mxu0
        %1663 = vmatprep.mubr.bf16.mxu0 %v892
        %1664 = vmatmul.mubr.bf16.gmra.mrb[0].mxu0 %v891
        %v1665 = vpop.f32.mrb[0].mxu0
        %v1666 = vadd.f32 %v1569, %v1665
        %v1667 = vpop.f32.mrb[0].mxu0
        %v1668 = vpop.f32.mrb[0].mxu0
        %v1669 = vadd.f32 %v1572, %v1668
        %v1670 = vpop.f32.mrb[0].mxu0
        %1671 = vmatprep.mubr.bf16.mxu0 %v901
        %1672 = vmatmul.mubr.bf16.gmra.mrb[0].mxu0 %v900
        %v1673 = vpop.f32.mrb[0].mxu0
        %v1674 = vadd.f32 %v1577, %v1673
        %v1675 = vpop.f32.mrb[0].mxu0
        %v1676 = vpop.f32.mrb[0].mxu0
        %v1677 = vadd.f32 %v1580, %v1676
        %v1678 = vpop.f32.mrb[0].mxu0
        %1679 = vmatprep.mubr.bf16.mxu0 %v910
        %1680 = vmatmul.mubr.bf16.gmra.mrb[0].mxu0 %v909
        %v1681 = vpop.f32.mrb[0].mxu0
        %v1682 = vadd.f32 %v1585, %v1681
        %v1683 = vpop.f32.mrb[0].mxu0
        %v1684 = vpop.f32.mrb[0].mxu0
        %v1685 = vadd.f32 %v1588, %v1684
        %v1686 = vpop.f32.mrb[0].mxu0
        %1687 = vmatprep.mubr.bf16.mxu0 %v919
        %1688 = vmatmul.mubr.bf16.gmra.mrb[0].mxu0 %v918
        %v1689 = vpop.f32.mrb[0].mxu0
        %v1690 = vadd.f32 %v1593, %v1689
        %v1691 = vpop.f32.mrb[0].mxu0
        %v1692 = vpop.f32.mrb[0].mxu0
        %v1693 = vadd.f32 %v1596, %v1692
        %v1694 = vpop.f32.mrb[0].mxu0
        %1695 = vmatprep.mubr.bf16.mxu0 %v928
        %1696 = vmatmul.mubr.bf16.gmra.mrb[0].mxu0 %v927
        %v1697 = vpop.f32.mrb[0].mxu0
        %v1698 = vadd.f32 %v1601, %v1697
        %v1699 = vpop.f32.mrb[0].mxu0
        %v1700 = vpop.f32.mrb[0].mxu0
        %v1701 = vadd.f32 %v1604, %v1700
        %v1702 = vpop.f32.mrb[0].mxu0
        %1703 = vdwg.mxu0
        %1704 = vmatprep.subr.bf16.mxu0 0
        %1705 = vmatpush1.bf16.msra.mxu0 %v1398
        %1706 = vmatprep.subr.bf16.mxu0 0
        %1707 = vmatpush1.bf16.msra.mxu0 %v1399
        %1708 = vmatprep.subr.bf16.mxu0 0
        %1709 = vmatpush1.bf16.msra.mxu0 %v1400
        %1710 = vmatprep.subr.bf16.mxu0 0
        %1711 = vmatpush1.bf16.msra.mxu0 %v1401
        %1712 = vmatprep.subr.bf16.mxu0 0
        %1713 = vmatpush1.bf16.msra.mxu0 %v1402
        %1714 = vmatprep.subr.bf16.mxu0 0
        %1715 = vmatpush1.bf16.msra.mxu0 %v1403
        %1716 = vmatprep.subr.bf16.mxu0 0
        %1717 = vmatpush1.bf16.msra.mxu0 %v1404
        %1718 = vmatprep.subr.bf16.mxu0 0
        %1719 = vmatpush1.bf16.msra.mxu0 %v1405
        %1720 = vmatprep.subr.bf16.mxu0 0
        %1721 = vmatpush1.bf16.msra.mxu0 %v1406
        %1722 = vmatprep.subr.bf16.mxu0 0
        %1723 = vmatpush1.bf16.msra.mxu0 %v1407
        %1724 = vmatprep.subr.bf16.mxu0 0
        %1725 = vmatpush1.bf16.msra.mxu0 %v1408
        %1726 = vmatprep.subr.bf16.mxu0 0
        %1727 = vmatpush1.bf16.msra.mxu0 %v1409
        %1728 = vmatprep.subr.bf16.mxu0 0
        %1729 = vmatpush1.bf16.msra.mxu0 %v1410
        %1730 = vmatprep.subr.bf16.mxu0 0
        %1731 = vmatpush1.bf16.msra.mxu0 %v1411
        %1732 = vmatprep.subr.bf16.mxu0 0
        %1733 = vmatpush1.bf16.msra.mxu0 %v1412
        %1734 = vmatprep.subr.bf16.mxu0 0
        %1735 = vmatpush1.bf16.msra.mxu0 %v1413
        %1736 = vmatprep.mubr.bf16.mxu0 %v867
        %1737 = vmatmul.mubr.bf16.gmra.mrb[0].mxu0 %v866
        %v1738 = vpop.f32.mrb[0].mxu0
        %v1739 = vadd.f32 %v1642, %v1738
        %v1740 = vpop.f32.mrb[0].mxu0
        %v1741 = vpop.f32.mrb[0].mxu0
        %v1742 = vadd.f32 %v1645, %v1741
        %v1743 = vpop.f32.mrb[0].mxu0
        %1744 = vmatprep.mubr.bf16.mxu0 %v876
        %1745 = vmatmul.mubr.bf16.gmra.mrb[0].mxu0 %v875
        %v1746 = vpop.f32.mrb[0].mxu0
        %v1747 = vadd.f32 %v1650, %v1746
        %v1748 = vpop.f32.mrb[0].mxu0
        %v1749 = vpop.f32.mrb[0].mxu0
        %v1750 = vadd.f32 %v1653, %v1749
        %v1751 = vpop.f32.mrb[0].mxu0
        %1752 = vmatprep.mubr.bf16.mxu0 %v885
        %1753 = vmatmul.mubr.bf16.gmra.mrb[0].mxu0 %v884
        %v1754 = vpop.f32.mrb[0].mxu0
        %v1755 = vadd.f32 %v1658, %v1754
        %v1756 = vpop.f32.mrb[0].mxu0
        %v1757 = vpop.f32.mrb[0].mxu0
        %v1758 = vadd.f32 %v1661, %v1757
        %v1759 = vpop.f32.mrb[0].mxu0
        %1760 = vmatprep.mubr.bf16.mxu0 %v894
        %1761 = vmatmul.mubr.bf16.gmra.mrb[0].mxu0 %v893
        %v1762 = vpop.f32.mrb[0].mxu0
        %v1763 = vadd.f32 %v1666, %v1762
        %v1764 = vpop.f32.mrb[0].mxu0
        %v1765 = vpop.f32.mrb[0].mxu0
        %v1766 = vadd.f32 %v1669, %v1765
        %v1767 = vpop.f32.mrb[0].mxu0
        %1768 = vmatprep.mubr.bf16.mxu0 %v903
        %1769 = vmatmul.mubr.bf16.gmra.mrb[0].mxu0 %v902
        %v1770 = vpop.f32.mrb[0].mxu0
        %v1771 = vadd.f32 %v1674, %v1770
        %v1772 = vpop.f32.mrb[0].mxu0
        %v1773 = vpop.f32.mrb[0].mxu0
        %v1774 = vadd.f32 %v1677, %v1773
        %v1775 = vpop.f32.mrb[0].mxu0
        %1776 = vmatprep.mubr.bf16.mxu0 %v912
        %1777 = vmatmul.mubr.bf16.gmra.mrb[0].mxu0 %v911
        %v1778 = vpop.f32.mrb[0].mxu0
        %v1779 = vadd.f32 %v1682, %v1778
        %v1780 = vpop.f32.mrb[0].mxu0
        %v1781 = vpop.f32.mrb[0].mxu0
        %v1782 = vadd.f32 %v1685, %v1781
        %v1783 = vpop.f32.mrb[0].mxu0
        %1784 = vmatprep.mubr.bf16.mxu0 %v921
        %1785 = vmatmul.mubr.bf16.gmra.mrb[0].mxu0 %v920
        %v1786 = vpop.f32.mrb[0].mxu0
        %v1787 = vadd.f32 %v1690, %v1786
        %v1788 = vpop.f32.mrb[0].mxu0
        %v1789 = vpop.f32.mrb[0].mxu0
        %v1790 = vadd.f32 %v1693, %v1789
        %v1791 = vpop.f32.mrb[0].mxu0
        %1792 = vmatprep.mubr.bf16.mxu0 %v930
        %1793 = vmatmul.mubr.bf16.gmra.mrb[0].mxu0 %v929
        %v1794 = vpop.f32.mrb[0].mxu0
        %v1795 = vadd.f32 %v1698, %v1794
        %v1796 = vpop.f32.mrb[0].mxu0
        %v1797 = vpop.f32.mrb[0].mxu0
        %v1798 = vadd.f32 %v1701, %v1797
        %v1799 = vpop.f32.mrb[0].mxu0
        %1800 = vdwg.mxu0
        %1801 = vmatprep.subr.bf16.mxu0 0
        %1802 = vmatpush1.bf16.msra.mxu0 %v1414
        %1803 = vmatprep.subr.bf16.mxu0 0
        %1804 = vmatpush1.bf16.msra.mxu0 %v1415
        %1805 = vmatprep.subr.bf16.mxu0 0
        %1806 = vmatpush1.bf16.msra.mxu0 %v1416
        %1807 = vmatprep.subr.bf16.mxu0 0
        %1808 = vmatpush1.bf16.msra.mxu0 %v1417
        %1809 = vmatprep.subr.bf16.mxu0 0
        %1810 = vmatpush1.bf16.msra.mxu0 %v1418
        %1811 = vmatprep.subr.bf16.mxu0 0
        %1812 = vmatpush1.bf16.msra.mxu0 %v1419
        %1813 = vmatprep.subr.bf16.mxu0 0
        %1814 = vmatpush1.bf16.msra.mxu0 %v1420
        %1815 = vmatprep.subr.bf16.mxu0 0
        %1816 = vmatpush1.bf16.msra.mxu0 %v1421
        %1817 = vmatprep.subr.bf16.mxu0 0
        %1818 = vmatpush1.bf16.msra.mxu0 %v1422
        %1819 = vmatprep.subr.bf16.mxu0 0
        %1820 = vmatpush1.bf16.msra.mxu0 %v1423
        %1821 = vmatprep.subr.bf16.mxu0 0
        %1822 = vmatpush1.bf16.msra.mxu0 %v1424
        %1823 = vmatprep.subr.bf16.mxu0 0
        %1824 = vmatpush1.bf16.msra.mxu0 %v1425
        %1825 = vmatprep.subr.bf16.mxu0 0
        %1826 = vmatpush1.bf16.msra.mxu0 %v1426
        %1827 = vmatprep.subr.bf16.mxu0 0
        %1828 = vmatpush1.bf16.msra.mxu0 %v1427
        %1829 = vmatprep.subr.bf16.mxu0 0
        %1830 = vmatpush1.bf16.msra.mxu0 %v1428
        %1831 = vmatprep.subr.bf16.mxu0 0
        %1832 = vmatpush1.bf16.msra.mxu0 %v1429
        %1833 = vmatprep.mubr.bf16.mxu0 %v869
        %1834 = vmatmul.mubr.bf16.gmra.mrb[0].mxu0 %v868
        %v1835 = vpop.f32.mrb[0].mxu0
        %v1836 = vadd.f32 %v1739, %v1835
        %v1837 = vpop.f32.mrb[0].mxu0
        %v1838 = vpop.f32.mrb[0].mxu0
        %v1839 = vadd.f32 %v1742, %v1838
        %v1840 = vpop.f32.mrb[0].mxu0
        %1841 = vmatprep.mubr.bf16.mxu0 %v878
        %1842 = vmatmul.mubr.bf16.gmra.mrb[0].mxu0 %v877
        %v1843 = vpop.f32.mrb[0].mxu0
        %v1844 = vadd.f32 %v1747, %v1843
        %v1845 = vpop.f32.mrb[0].mxu0
        %v1846 = vpop.f32.mrb[0].mxu0
        %v1847 = vadd.f32 %v1750, %v1846
        %v1848 = vpop.f32.mrb[0].mxu0
        %1849 = vmatprep.mubr.bf16.mxu0 %v887
        %1850 = vmatmul.mubr.bf16.gmra.mrb[0].mxu0 %v886
        %v1851 = vpop.f32.mrb[0].mxu0
        %v1852 = vadd.f32 %v1755, %v1851
        %v1853 = vpop.f32.mrb[0].mxu0
        %v1854 = vpop.f32.mrb[0].mxu0
        %v1855 = vadd.f32 %v1758, %v1854
        %v1856 = vpop.f32.mrb[0].mxu0
        %1857 = vmatprep.mubr.bf16.mxu0 %v896
        %1858 = vmatmul.mubr.bf16.gmra.mrb[0].mxu0 %v895
        %v1859 = vpop.f32.mrb[0].mxu0
        %v1860 = vadd.f32 %v1763, %v1859
        %v1861 = vpop.f32.mrb[0].mxu0
        %v1862 = vpop.f32.mrb[0].mxu0
        %v1863 = vadd.f32 %v1766, %v1862
        %v1864 = vpop.f32.mrb[0].mxu0
        %1865 = vmatprep.mubr.bf16.mxu0 %v905
        %1866 = vmatmul.mubr.bf16.gmra.mrb[0].mxu0 %v904
        %v1867 = vpop.f32.mrb[0].mxu0
        %v1868 = vadd.f32 %v1771, %v1867
        %v1869 = vpop.f32.mrb[0].mxu0
        %v1870 = vpop.f32.mrb[0].mxu0
        %v1871 = vadd.f32 %v1774, %v1870
        %v1872 = vpop.f32.mrb[0].mxu0
        %1873 = vmatprep.mubr.bf16.mxu0 %v914
        %1874 = vmatmul.mubr.bf16.gmra.mrb[0].mxu0 %v913
        %v1875 = vpop.f32.mrb[0].mxu0
        %v1876 = vadd.f32 %v1779, %v1875
        %v1877 = vpop.f32.mrb[0].mxu0
        %v1878 = vpop.f32.mrb[0].mxu0
        %v1879 = vadd.f32 %v1782, %v1878
        %v1880 = vpop.f32.mrb[0].mxu0
        %1881 = vmatprep.mubr.bf16.mxu0 %v923
        %1882 = vmatmul.mubr.bf16.gmra.mrb[0].mxu0 %v922
        %v1883 = vpop.f32.mrb[0].mxu0
        %v1884 = vadd.f32 %v1787, %v1883
        %v1885 = vpop.f32.mrb[0].mxu0
        %v1886 = vpop.f32.mrb[0].mxu0
        %v1887 = vadd.f32 %v1790, %v1886
        %v1888 = vpop.f32.mrb[0].mxu0
        %1889 = vmatprep.mubr.bf16.mxu0 %v932
        %1890 = vmatmul.mubr.bf16.gmra.mrb[0].mxu0 %v931
        %v1891 = vpop.f32.mrb[0].mxu0
        %v1892 = vadd.f32 %v1795, %v1891
        %v1893 = vpop.f32.mrb[0].mxu0
        %v1894 = vpop.f32.mrb[0].mxu0
        %v1895 = vadd.f32 %v1798, %v1894
        %v1896 = vpop.f32.mrb[0].mxu0
        %1897 = vdwg.mxu0
        %1898 = vmatprep.subr.bf16.mxu0 0
        %1899 = vmatpush1.bf16.msra.mxu0 %v1430
        %1900 = vmatprep.subr.bf16.mxu0 0
        %1901 = vmatpush1.bf16.msra.mxu0 %v1431
        %1902 = vmatprep.subr.bf16.mxu0 0
        %1903 = vmatpush1.bf16.msra.mxu0 %v1432
        %1904 = vmatprep.subr.bf16.mxu0 0
        %1905 = vmatpush1.bf16.msra.mxu0 %v1433
        %1906 = vmatprep.subr.bf16.mxu0 0
        %1907 = vmatpush1.bf16.msra.mxu0 %v1434
        %1908 = vmatprep.subr.bf16.mxu0 0
        %1909 = vmatpush1.bf16.msra.mxu0 %v1435
        %1910 = vmatprep.subr.bf16.mxu0 0
        %1911 = vmatpush1.bf16.msra.mxu0 %v1436
        %1912 = vmatprep.subr.bf16.mxu0 0
        %1913 = vmatpush1.bf16.msra.mxu0 %v1437
        %1914 = vmatprep.subr.bf16.mxu0 0
        %1915 = vmatpush1.bf16.msra.mxu0 0
        %1916 = vmatprep.subr.bf16.mxu0 0
        %1917 = vmatpush1.bf16.msra.mxu0 0
        %1918 = vmatprep.subr.bf16.mxu0 0
        %1919 = vmatpush1.bf16.msra.mxu0 0
        %1920 = vmatprep.subr.bf16.mxu0 0
        %1921 = vmatpush1.bf16.msra.mxu0 0
        %1922 = vmatprep.subr.bf16.mxu0 0
        %1923 = vmatpush1.bf16.msra.mxu0 0
        %1924 = vmatprep.subr.bf16.mxu0 0
        %1925 = vmatpush1.bf16.msra.mxu0 0
        %1926 = vmatprep.subr.bf16.mxu0 0
        %1927 = vmatpush1.bf16.msra.mxu0 0
        %1928 = vmatprep.subr.bf16.mxu0 0
        %1929 = vmatpush1.bf16.msra.mxu0 0
        %1930 = vmatprep.mubr.bf16.mxu0 0
        %1931 = vmatmul.mubr.bf16.gmra.mrb[0].mxu0 %v870
        %v1932 = vpop.f32.mrb[0].mxu0
        %v1933 = vadd.f32 %v1836, %v1932
        %v1934 = vpop.f32.mrb[0].mxu0
        %v1935 = vpop.f32.mrb[0].mxu0
        %v1936 = vadd.f32 %v1839, %v1935
        %v1937 = vpop.f32.mrb[0].mxu0
        %1938 = vmatprep.mubr.bf16.mxu0 0
        %1939 = vmatmul.mubr.bf16.gmra.mrb[0].mxu0 %v879
        %v1940 = vpop.f32.mrb[0].mxu0
        %v1941 = vadd.f32 %v1844, %v1940
        %v1942 = vpop.f32.mrb[0].mxu0
        %v1943 = vpop.f32.mrb[0].mxu0
        %v1944 = vadd.f32 %v1847, %v1943
        %v1945 = vpop.f32.mrb[0].mxu0
        %1946 = vmatprep.mubr.bf16.mxu0 0
        %1947 = vmatmul.mubr.bf16.gmra.mrb[0].mxu0 %v888
        %v1948 = vpop.f32.mrb[0].mxu0
        %v1949 = vadd.f32 %v1852, %v1948
        %v1950 = vpop.f32.mrb[0].mxu0
        %v1951 = vpop.f32.mrb[0].mxu0
        %v1952 = vadd.f32 %v1855, %v1951
        %v1953 = vpop.f32.mrb[0].mxu0
        %1954 = vmatprep.mubr.bf16.mxu0 0
        %1955 = vmatmul.mubr.bf16.gmra.mrb[0].mxu0 %v897
        %v1956 = vpop.f32.mrb[0].mxu0
        %v1957 = vadd.f32 %v1860, %v1956
        %v1958 = vpop.f32.mrb[0].mxu0
        %v1959 = vpop.f32.mrb[0].mxu0
        %v1960 = vadd.f32 %v1863, %v1959
        %v1961 = vpop.f32.mrb[0].mxu0
        %1962 = vmatprep.mubr.bf16.mxu0 0
        %1963 = vmatmul.mubr.bf16.gmra.mrb[0].mxu0 %v906
        %v1964 = vpop.f32.mrb[0].mxu0
        %v1965 = vadd.f32 %v1868, %v1964
        %v1966 = vpop.f32.mrb[0].mxu0
        %v1967 = vpop.f32.mrb[0].mxu0
        %v1968 = vadd.f32 %v1871, %v1967
        %v1969 = vpop.f32.mrb[0].mxu0
        %1970 = vmatprep.mubr.bf16.mxu0 0
        %1971 = vmatmul.mubr.bf16.gmra.mrb[0].mxu0 %v915
        %v1972 = vpop.f32.mrb[0].mxu0
        %v1973 = vadd.f32 %v1876, %v1972
        %v1974 = vpop.f32.mrb[0].mxu0
        %v1975 = vpop.f32.mrb[0].mxu0
        %v1976 = vadd.f32 %v1879, %v1975
        %v1977 = vpop.f32.mrb[0].mxu0
        %1978 = vmatprep.mubr.bf16.mxu0 0
        %1979 = vmatmul.mubr.bf16.gmra.mrb[0].mxu0 %v924
        %v1980 = vpop.f32.mrb[0].mxu0
        %v1981 = vadd.f32 %v1884, %v1980
        %v1982 = vpop.f32.mrb[0].mxu0
        %v1983 = vpop.f32.mrb[0].mxu0
        %v1984 = vadd.f32 %v1887, %v1983
        %v1985 = vpop.f32.mrb[0].mxu0
        %1986 = vmatprep.mubr.bf16.mxu0 0
        %1987 = vmatmul.mubr.bf16.gmra.mrb[0].mxu0 %v933
        %v1988 = vpop.f32.mrb[0].mxu0
        %v1989 = vadd.f32 %v1892, %v1988
        %v1990 = vpop.f32.mrb[0].mxu0
        %v1991 = vpop.f32.mrb[0].mxu0
        %v1992 = vadd.f32 %v1895, %v1991
        %v1993 = vpop.f32.mrb[0].mxu0
        %1994 = vdwg.mxu0
        %v1995 = vld [vmem:[%s2] sm:$0x1]
        %v1997 = vlaneseq
        %v1998 = vshrl.u32 %v1997, 7
        %v1999 = vsub.s32 0, %v1998
        %v2000 = vrot.slane %v1995, %v1999
        %v2002 = vmul.f32 %v1933, %v2000
        %v2003 = vmul.f32 %v1936, %v2000
        %v2004 = vmul.f32 %v1941, %v2000
        %v2005 = vmul.f32 %v1944, %v2000
        %v2006 = vmul.f32 %v1949, %v2000
        %v2007 = vmul.f32 %v1952, %v2000
        %v2008 = vmul.f32 %v1957, %v2000
        %v2009 = vmul.f32 %v1960, %v2000
        %v2010 = vmul.f32 %v1965, %v2000
        %v2011 = vmul.f32 %v1968, %v2000
        %v2012 = vmul.f32 %v1973, %v2000
        %v2013 = vmul.f32 %v1976, %v2000
        %v2014 = vmul.f32 %v1981, %v2000
        %v2015 = vmul.f32 %v1984, %v2000
        %v2016 = vmul.f32 %v1989, %v2000
        %v2017 = vmul.f32 %v1992, %v2000
        %v2018 = vld [vmem:[%s3] sm:$0x1]
        %v2020 = vlaneseq
        %v2021 = vshrl.u32 %v2020, 7
        %v2022 = vsub.s32 0, %v2021
        %v2023 = vrot.slane %v2018, %v2022
        %v2025 = vadd.f32 %v2002, %v2023
        %v2026 = vadd.f32 %v2003, %v2023
        %v2027 = vadd.f32 %v2004, %v2023
        %v2028 = vadd.f32 %v2005, %v2023
        %v2029 = vadd.f32 %v2006, %v2023
        %v2030 = vadd.f32 %v2007, %v2023
        %v2031 = vadd.f32 %v2008, %v2023
        %v2032 = vadd.f32 %v2009, %v2023
        %v2033 = vadd.f32 %v2010, %v2023
        %v2034 = vadd.f32 %v2011, %v2023
        %v2035 = vadd.f32 %v2012, %v2023
        %v2036 = vadd.f32 %v2013, %v2023
        %v2037 = vadd.f32 %v2014, %v2023
        %v2038 = vadd.f32 %v2015, %v2023
        %v2039 = vadd.f32 %v2016, %v2023
        %v2040 = vadd.f32 %v2017, %v2023
        %v2041 = vmax.f32 %v2025, 0.0
        %v2042 = vmax.f32 %v2026, 0.0
        %v2043 = vmax.f32 %v2027, 0.0
        %v2044 = vmax.f32 %v2028, 0.0
        %v2045 = vmax.f32 %v2029, 0.0
        %v2046 = vmax.f32 %v2030, 0.0
        %v2047 = vmax.f32 %v2031, 0.0
        %v2048 = vmax.f32 %v2032, 0.0
        %v2049 = vmax.f32 %v2033, 0.0
        %v2050 = vmax.f32 %v2034, 0.0
        %v2051 = vmax.f32 %v2035, 0.0
        %v2052 = vmax.f32 %v2036, 0.0
        %v2053 = vmax.f32 %v2037, 0.0
        %v2054 = vmax.f32 %v2038, 0.0
        %v2055 = vmax.f32 %v2039, 0.0
        %v2056 = vmax.f32 %v2040, 0.0
        %v2057 = vpack.c.bf16 %v2042, %v2041
        %v2058 = vpack.c.bf16 %v2044, %v2043
        %v2059 = vpack.c.bf16 %v2046, %v2045
        %v2060 = vpack.c.bf16 %v2048, %v2047
        %v2061 = vpack.c.bf16 %v2050, %v2049
        %v2062 = vpack.c.bf16 %v2052, %v2051
        %v2063 = vpack.c.bf16 %v2054, %v2053
        %v2064 = vpack.c.bf16 %v2056, %v2055
        %v2073 = vunpack.c.l.b16 %v2057
        %v2074 = vunpack.c.h.b16 %v2057
        %v2075 = vunpack.c.l.b16 %v2058
        %v2076 = vunpack.c.h.b16 %v2058
        %v2077 = vunpack.c.l.b16 %v2059
        %v2078 = vunpack.c.h.b16 %v2059
        %v2079 = vunpack.c.l.b16 %v2060
        %v2080 = vunpack.c.h.b16 %v2060
        %v2081 = vunpack.c.l.b16 %v2061
        %v2082 = vunpack.c.h.b16 %v2061
        %v2083 = vunpack.c.l.b16 %v2062
        %v2084 = vunpack.c.h.b16 %v2062
        %v2085 = vunpack.c.l.b16 %v2063
        %v2086 = vunpack.c.h.b16 %v2063
        %v2087 = vunpack.c.l.b16 %v2064
        %v2088 = vunpack.c.h.b16 %v2064
        %v2089 = vpack.c.b16 %v2073, %v2073
        %v2090 = vpack.c.b16 %v2074, %v2074
        %v2091 = vpack.c.b16 %v2075, %v2075
        %v2092 = vpack.c.b16 %v2076, %v2076
        %v2093 = vpack.c.b16 %v2077, %v2077
        %v2094 = vpack.c.b16 %v2078, %v2078
        %v2095 = vpack.c.b16 %v2079, %v2079
        %v2096 = vpack.c.b16 %v2080, %v2080
        %v2097 = vpack.c.b16 %v2081, %v2081
        %v2098 = vpack.c.b16 %v2082, %v2082
        %v2099 = vpack.c.b16 %v2083, %v2083
        %v2100 = vpack.c.b16 %v2084, %v2084
        %v2101 = vpack.c.b16 %v2085, %v2085
        %v2102 = vpack.c.b16 %v2086, %v2086
        %v2103 = vpack.c.b16 %v2087, %v2087
        %v2104 = vpack.c.b16 %v2088, %v2088
        %2121 = vst [vmem:[%s204] sm:$0xf] %v2089
        %2122 = vst [vmem:[%s204 + $0x4] sm:$0xf] %v2090
        %2123 = vst [vmem:[%s204 + $0x8] sm:$0xf] %v2091
        %2124 = vst [vmem:[%s204 + $0xc] sm:$0xf] %v2092
        %2125 = vst [vmem:[%s204 + $0x10] sm:$0xf] %v2093
        %2126 = vst [vmem:[%s204 + $0x14] sm:$0xf] %v2094
        %2127 = vst [vmem:[%s204 + $0x18] sm:$0xf] %v2095
        %2128 = vst [vmem:[%s204 + $0x1c] sm:$0xf] %v2096
        %2129 = vst [vmem:[%s204 + $0x20] sm:$0xf] %v2097
        %2130 = vst [vmem:[%s204 + $0x24] sm:$0xf] %v2098
        %2131 = vst [vmem:[%s204 + $0x28] sm:$0xf] %v2099
        %2132 = vst [vmem:[%s204 + $0x2c] sm:$0xf] %v2100
        %2133 = vst [vmem:[%s204 + $0x30] sm:$0xf] %v2101
        %2134 = vst [vmem:[%s204 + $0x34] sm:$0xf] %v2102
        %2135 = vst [vmem:[%s204 + $0x38] sm:$0xf] %v2103
        %2136 = vst [vmem:[%s204 + $0x3c] sm:$0xf] %v2104
        %s2137 = sand.u32 %s129, 1
        %s2138 = scalar_lea.sflag [#allocation5], %s2137
        %s2139 = sand.u32 %s129, 1
        %s2140 = smul.addr %s2139, 64
        %s2141 = scalar_lea.vmem [#allocation4], %s2140
        // Predicated region
        $region37: #{tpu_custom_call.1} parent=35 // pred_check
          %p2142 = pneg %p139
        $region38: #{tpu_custom_call.1} parent=35 // pred_check_branch
          %2144 = sbr.rel (%p2142) target = $region40
        $region39: #{tpu_custom_call.1} parent=35 // pred_region
          %s2145 = smul.u32 8, %s23
          %s2147 = ssub.s32 1024, 1024
          %2148 = vsyncadd %s2138, %s2147
          %s2149 = smul.addr %s2145, 2
          %s2150 = smul.addr %s22, 32
          %s2151 = sadd.s32 %s2149, %s2150
          %s2152 = smul.addr %s2151, 64
          %s2153 = scalar_lea.hbm %s4, %s2152
          %s2154 = sshll.u32 %s2141, 4
          %s2155 = int_to_ptr.vmem [resolvable:$true] %s2154
          %2160 = dma.vmem_to_hbm [thread:$0]  %s2155, 1024, %s2153, %s2138, 64, 64, 4
        $region40: #{tpu_custom_call.1} parent=35 // pred_fallthru
          _
      $region36: #{tpu_custom_call.1} parent=5 // pred_fallthru
        _
      %p2161 = scmp.le.s32.totalorder 2, %s13
      // Predicated region
      $region41: #{tpu_custom_call.1} parent=5 // pred_check
        %p2162 = pneg %p2161
      $region42: #{tpu_custom_call.1} parent=5 // pred_check_branch
        %2164 = sbr.rel (%p2162) target = $region44
      $region43: #{tpu_custom_call.1} parent=5 // pred_region
        %s2165 = ssub.s32 %s13, 2
        // Predicated region
        $region45: #{tpu_custom_call.1} parent=43 // pred_check
          %p2166 = pneg %p145
        $region46: #{tpu_custom_call.1} parent=43 // pred_check_branch
          %2168 = sbr.rel (%p2166) target = $region48
        $region47: #{tpu_custom_call.1} parent=43 // pred_region
          %s2169 = sand.u32 %s130, 1
          %s2170 = scalar_lea.sflag [#allocation5], %s2169
          %s2171 = sand.u32 %s130, 1
          %s2172 = smul.addr %s2171, 64
          %s2173 = scalar_lea.vmem [#allocation4], %s2172
          %2174 = dma.done %s2170, 1024
        $region48: #{tpu_custom_call.1} parent=43 // pred_fallthru
          _
      $region44: #{tpu_custom_call.1} parent=5 // pred_fallthru
        _
    $region6: #{tpu_custom_call.1} parent=1 // loop_footer
      %s17 = sadd.s32 1, %s13
    $region7: #{tpu_custom_call.1} parent=1 // loop_footer_branch
      %12 = sbr.rel target = $region3
    $region8: #{tpu_custom_call.1} parent=1 // loop_exit
      _
    %2175 = vsyncpa [#allocation5], 1
    %s2176 = scalar_lea.sflag [#allocation5], 1
    %2177 = vsyncpa %s2176, 1

</llo_original>
